<compile_context>
chip_gen: v7x
topology: tpu7x:2x2x1
jax: 0.10.0
libtpu: 0.0.40
codegen_flags: <defaults>
</compile_context>

<pallas_src>
import functools

import numpy as np
import jax
import jax.numpy as jnp
from jax.experimental import pallas as pl
from jax.experimental.pallas import tpu as pltpu


def _leaky(y):
    return jnp.where(y > 0, y, 0.1 * y)


def _conv_block_kernel(xa_ref, xt_ref, xb_ref, w1_ref, b1_ref, w2_ref, b2_ref,
                       o_ref, mid_ref, pat_ref, *, W):
    """One (batch, row-tile) grid step.

    xa_ref : (1, C_in, halo_lanes)  lane block whose LAST W lanes are the image
                                    row just above the tile
    xt_ref : (1, C_in, Th*W)        the tile's rows, pixels flattened on lanes
    xb_ref : (1, C_in, halo_lanes)  lane block whose FIRST W lanes are the image
                                    row just below the tile
    w1_ref : (C_mid, C_in)          1x1 conv weight, BN scale folded in
    b1_ref : (C_mid, 1)             BN shift, layer 1 (f32)
    w2_ref : (C_out, 9*C_mid)       3x3 conv weight [tap-major], BN scale folded
    b2_ref : (C_out, 1)             BN shift, layer 2 (f32)
    o_ref  : (1, C_out, Th*W)
    mid_ref: (C_mid, (Th+4)*W)      row-padded layer-1 activations
                                    [guard | top halo | Th rows | bottom halo | guard]
    pat_ref: (9*C_mid, Th*W)        stacked-K im2col buffer
    """
    t = pl.program_id(1)
    n_t = pl.num_programs(1)
    C_mid = mid_ref.shape[0]
    TW = o_ref.shape[-1]
    Th = TW // W
    halo_lanes = xa_ref.shape[-1]

    w1 = w1_ref[...]
    b1 = b1_ref[...]
    zero_row = jnp.zeros((C_mid, W), mid_ref.dtype)

    # Guard columns are only ever read at masked corner taps -> keep them zero
    # (scratch persists across grid steps, so re-zero every step).
    mid_ref[:, 0:W] = zero_row
    mid_ref[:, (Th + 3) * W:] = zero_row

    # ---- layer 1: 1x1 conv (+BN shift) + LeakyReLU on the tile rows ----
    h = jnp.dot(w1, xt_ref[0], preferred_element_type=jnp.float32) + b1
    mid_ref[:, 2 * W:(Th + 2) * W] = _leaky(h).astype(mid_ref.dtype)

    # Halo row above the tile (zeros at the image top == conv zero padding).
    @pl.when(t == 0)
    def _():
        mid_ref[:, W:2 * W] = zero_row

    @pl.when(t > 0)
    def _():
        xa = xa_ref[0, :, halo_lanes - W:]
        ha = jnp.dot(w1, xa, preferred_element_type=jnp.float32) + b1
        mid_ref[:, W:2 * W] = _leaky(ha).astype(mid_ref.dtype)

    # Halo row below the tile (zeros at the image bottom).
    @pl.when(t == n_t - 1)
    def _():
        mid_ref[:, (Th + 2) * W:(Th + 3) * W] = zero_row

    @pl.when(t < n_t - 1)
    def _():
        xb = xb_ref[0, :, :W]
        hb = jnp.dot(w1, xb, preferred_element_type=jnp.float32) + b1
        mid_ref[:, (Th + 2) * W:(Th + 3) * W] = _leaky(hb).astype(mid_ref.dtype)

    # ---- layer 2: 3x3 conv (pad=1) as ONE stacked-K matmul ----
    # Column masks (only dx=+-1 need masking; row padding handles dy edges).
    q = jax.lax.broadcasted_iota(jnp.int32, (1, TW), 1)
    col = (q & (W - 1)) if (W & (W - 1)) == 0 else (q % W)
    mask_l = (col >= 1).astype(mid_ref.dtype)       # for taps with dx = -1
    mask_r = (col <= W - 2).astype(mid_ref.dtype)   # for taps with dx = +1

    mid = mid_ref[...]
    for dy in (-1, 0, 1):
        for dx in (-1, 0, 1):
            s = (dy + 2) * W + dx                   # static slice start
            tap = mid[:, s:s + TW]                  # (C_mid, TW)
            if dx == -1:
                tap = tap * mask_l
            elif dx == 1:
                tap = tap * mask_r
            i = (dy + 1) * 3 + (dx + 1)             # tap index ky*3+kx
            pat_ref[i * C_mid:(i + 1) * C_mid, :] = tap

    acc = jnp.dot(w2_ref[...], pat_ref[...], preferred_element_type=jnp.float32)
    o_ref[0] = _leaky(acc + b2_ref[...]).astype(o_ref.dtype)


def _vmem_estimate(Th, W, C_in, C_mid, C_out, cd_bytes, out_bytes):
    tw = Th * W
    halo = min(128, tw)
    bufs = (C_in * tw + 2 * C_in * halo) * cd_bytes + C_out * tw * out_bytes
    scratch = (C_mid * (Th + 4) * W + 9 * C_mid * tw) * cd_bytes
    live = C_out * tw * 4 + 9 * C_mid * tw * cd_bytes   # f32 acc + tap values
    return 2 * bufs + scratch + live                     # in/out double-buffered


def _choose_row_tile(H, W, C_in, C_mid, C_out, cd_bytes, out_bytes, budget):
    # TODO(synk): W > 128 needs multi-block halo rows; use whole-image tiles.
    if W > 128:
        return H
    candidates = [d for d in range(H, 0, -1)
                  if H % d == 0 and (d == H or (d * W) % 128 == 0)]
    for Th in candidates:
        if _vmem_estimate(Th, W, C_in, C_mid, C_out, cd_bytes, out_bytes) <= budget:
            return Th
    return candidates[-1]


def conv_block_forward(x, w1, g1, beta1, m1, v1, w2, g2, beta2, m2, v2,
                       eps=1e-5, *, compute_dtype=None, row_tile=None,
                       vmem_limit_bytes=48 * 1024 * 1024):
    """x: (B, C_in, H, W); w1: (C_mid, C_in, 1, 1); w2: (C_out, C_mid, 3, 3);
    per-layer inference-mode BatchNorm params (gamma, beta, running_mean,
    running_var).  Returns (B, C_out, H, W) with C_out == C_in."""
    B, C_in, H, W = x.shape
    C_mid = w1.shape[0]
    C_out = w2.shape[0]
    HW = H * W
    if compute_dtype is None:
        compute_dtype = x.dtype
    cd_bytes = np.dtype(compute_dtype).itemsize
    out_dtype = x.dtype
    out_bytes = np.dtype(out_dtype).itemsize

    # Fold inference-mode BN: scale into the conv weights, keep only the shift.
    inv1 = g1 / jnp.sqrt(v1 + eps)
    w1f = (w1.reshape(C_mid, C_in) * inv1[:, None]).astype(compute_dtype)
    b1 = (beta1 - m1 * inv1).reshape(C_mid, 1).astype(jnp.float32)
    inv2 = g2 / jnp.sqrt(v2 + eps)
    # (C_out, C_mid, 3, 3) -> (C_out, ky, kx, C_mid) -> (C_out, 9*C_mid), tap-major.
    w2f = (jnp.transpose(w2, (0, 2, 3, 1)).reshape(C_out, 9 * C_mid)
           * inv2[:, None]).astype(compute_dtype)
    b2 = (beta2 - m2 * inv2).reshape(C_out, 1).astype(jnp.float32)

    # Free reshape only: pixels land on the 128-wide lane axis.
    x_flat = x.reshape(B, C_in, HW).astype(compute_dtype)

    # Row tiling (v7x-safe VMEM budget by default; raise on v5e/v6e).
    if row_tile is None:
        Th = _choose_row_tile(H, W, C_in, C_mid, C_out, cd_bytes, out_bytes,
                              budget=int(0.75 * vmem_limit_bytes))
    else:
        Th = row_tile
    assert H % Th == 0, (H, Th)
    assert Th == H or ((Th * W) % 128 == 0 and W <= 128), (Th, W)
    n_t = H // Th
    TW = Th * W
    halo_lanes = 128 if HW >= 128 else HW

    if n_t > 1:
        bpt = TW // 128                   # 128-lane blocks per row tile
        nblk = HW // 128
        above_map = lambda b, t: (b, 0, jnp.maximum(t * bpt - 1, 0))
        below_map = lambda b, t: (b, 0, jnp.minimum((t + 1) * bpt, nblk - 1))
    else:
        above_map = lambda b, t: (b, 0, 0)
        below_map = lambda b, t: (b, 0, 0)

    kernel = functools.partial(_conv_block_kernel, W=W)

    flops = B * HW * 2 * (C_in * C_mid + 9 * C_mid * C_out)
    bytes_accessed = (B * C_in * HW * cd_bytes + B * C_out * HW * out_bytes
                      + (C_mid * C_in + 9 * C_out * C_mid) * cd_bytes
                      + 4 * (C_mid + C_out))

    out_flat = pl.pallas_call(
        kernel,
        out_shape=jax.ShapeDtypeStruct((B, C_out, HW), out_dtype),
        grid_spec=pltpu.PrefetchScalarGridSpec(
            num_scalar_prefetch=0,
            grid=(B, n_t),
            in_specs=[
                pl.BlockSpec((1, C_in, halo_lanes), above_map),          # row above
                pl.BlockSpec((1, C_in, TW), lambda b, t: (b, 0, t)),     # tile rows
                pl.BlockSpec((1, C_in, halo_lanes), below_map),          # row below
                pl.BlockSpec((C_mid, C_in), lambda b, t: (0, 0)),
                pl.BlockSpec((C_mid, 1), lambda b, t: (0, 0)),
                pl.BlockSpec((C_out, 9 * C_mid), lambda b, t: (0, 0)),
                pl.BlockSpec((C_out, 1), lambda b, t: (0, 0)),
            ],
            out_specs=pl.BlockSpec((1, C_out, TW), lambda b, t: (b, 0, t)),
            scratch_shapes=[
                pltpu.VMEM((C_mid, (Th + 4) * W), compute_dtype),  # row-padded mid
                pltpu.VMEM((9 * C_mid, TW), compute_dtype),        # im2col stack
            ],
        ),
        compiler_params=pltpu.CompilerParams(
            dimension_semantics=("parallel", "parallel"),
            vmem_limit_bytes=vmem_limit_bytes,
        ),
        cost_estimate=pl.CostEstimate(
            flops=flops, transcendentals=0, bytes_accessed=bytes_accessed),
    )(x_flat, x_flat, x_flat, w1f, b1, w2f, b2)

    return out_flat.reshape(B, C_out, H, W)


def conv_block_reference(x, w1, g1, beta1, m1, v1, w2, g2, beta2, m2, v2,
                         eps=1e-5):
    """Pure-JAX reference mirroring the PyTorch forward (inference-mode BN)."""
    def bn(y, g, b, m, v):
        return ((y - m[None, :, None, None])
                / jnp.sqrt(v[None, :, None, None] + eps)
                * g[None, :, None, None] + b[None, :, None, None])

    dn = ("NCHW", "OIHW", "NCHW")
    hp = jax.lax.Precision.HIGHEST
    y = jax.lax.conv_general_dilated(x, w1, (1, 1), "VALID",
                                     dimension_numbers=dn, precision=hp)
    y = _leaky(bn(y, g1, beta1, m1, v1))
    z = jax.lax.conv_general_dilated(y, w2, (1, 1), ((1, 1), (1, 1)),
                                     dimension_numbers=dn, precision=hp)
    z = _leaky(bn(z, g2, beta2, m2, v2))
    return z


if __name__ == "__main__":
    # ConvBlock shapes: C_in even, H*W lane-friendly.
    B, C_in, H, W = 2, 32, 16, 16
    C_mid, C_out = C_in // 2, C_in

    key = jax.random.PRNGKey(0)
    ks = jax.random.split(key, 11)
    x = jax.random.normal(ks[0], (B, C_in, H, W), dtype=jnp.float32)
    w1 = jax.random.normal(ks[1], (C_mid, C_in, 1, 1), dtype=jnp.float32) * 0.1
    w2 = jax.random.normal(ks[2], (C_out, C_mid, 3, 3), dtype=jnp.float32) * 0.1
    g1 = 1.0 + 0.1 * jax.random.normal(ks[3], (C_mid,), dtype=jnp.float32)
    beta1 = 0.1 * jax.random.normal(ks[4], (C_mid,), dtype=jnp.float32)
    m1 = 0.1 * jax.random.normal(ks[5], (C_mid,), dtype=jnp.float32)
    v1 = jax.random.uniform(ks[6], (C_mid,), jnp.float32, 0.5, 1.5)
    g2 = 1.0 + 0.1 * jax.random.normal(ks[7], (C_out,), dtype=jnp.float32)
    beta2 = 0.1 * jax.random.normal(ks[8], (C_out,), dtype=jnp.float32)
    m2 = 0.1 * jax.random.normal(ks[9], (C_out,), dtype=jnp.float32)
    v2 = jax.random.uniform(ks[10], (C_out,), jnp.float32, 0.5, 1.5)

    ref = conv_block_reference(x, w1, g1, beta1, m1, v1, w2, g2, beta2, m2, v2)

    # f32, row-tiled grid (2 row tiles per image -> exercises the halo path).
    out = conv_block_forward(x, w1, g1, beta1, m1, v1, w2, g2, beta2, m2, v2,
                             row_tile=8)
    out = jax.block_until_ready(out)
    assert out.shape == (B, C_out, H, W), out.shape
    err = jnp.max(jnp.abs(out - ref))
    assert jnp.allclose(out, ref, atol=2e-3, rtol=2e-3), \
        f"f32 tiled mismatch vs reference: max abs err {err}"

    # f32, whole-image tiles (default tile chooser).
    out_full = conv_block_forward(x, w1, g1, beta1, m1, v1, w2, g2, beta2, m2, v2)
    out_full = jax.block_until_ready(out_full)
    err = jnp.max(jnp.abs(out_full - ref))
    assert jnp.allclose(out_full, ref, atol=2e-3, rtol=2e-3), \
        f"f32 whole-image mismatch vs reference: max abs err {err}"

    # bf16 I/O + bf16 MXU operands (f32 accumulation), looser tolerance.
    out_bf16 = conv_block_forward(x.astype(jnp.bfloat16), w1, g1, beta1, m1, v1,
                                  w2, g2, beta2, m2, v2,
                                  compute_dtype=jnp.bfloat16, row_tile=8)
    out_bf16 = jax.block_until_ready(out_bf16).astype(jnp.float32)
    err = jnp.max(jnp.abs(out_bf16 - ref))
    assert jnp.allclose(out_bf16, ref, atol=8e-2, rtol=8e-2), \
        f"bf16 mismatch vs reference: max abs err {err}"

    print("KERNEL_OK")
</pallas_src>

<mosaic_0001>
module attributes {stable_mosaic.version = 11 : i64} {
  func.func @_conv_block_kernel(%arg0: i32, %arg1: i32, %arg2: memref<1x32x128xf32, #tpu.memory_space<vmem>>, %arg3: memref<1x32x128xf32, #tpu.memory_space<vmem>>, %arg4: memref<1x32x128xf32, #tpu.memory_space<vmem>>, %arg5: memref<16x32xf32, #tpu.memory_space<vmem>>, %arg6: memref<16x1xf32, #tpu.memory_space<vmem>>, %arg7: memref<32x144xf32, #tpu.memory_space<vmem>>, %arg8: memref<32x1xf32, #tpu.memory_space<vmem>>, %arg9: memref<1x32x128xf32, #tpu.memory_space<vmem>>, %arg10: memref<16x192xf32, #tpu.memory_space<vmem>>, %arg11: memref<144x128xf32, #tpu.memory_space<vmem>>) attributes {dimension_semantics = [#tpu.dimension_semantics<parallel>, #tpu.dimension_semantics<parallel>], iteration_bounds = array<i64: 2, 2>, scalar_prefetch = 0 : i64, scratch_operands = 2 : i64, tpu.core_type = #tpu.core_type<tc>, window_params = [{transform_indices = @transform_0, window_bounds = array<i64: 1, 32, 128>}, {transform_indices = @transform_1, window_bounds = array<i64: 1, 32, 128>}, {transform_indices = @transform_2, window_bounds = array<i64: 1, 32, 128>}, {pipeline_mode = #tpu.pipeline_mode<synchronous>, transform_indices = @transform_3, window_bounds = array<i64: 16, 32>}, {pipeline_mode = #tpu.pipeline_mode<synchronous>, transform_indices = @transform_4, window_bounds = array<i64: 16, 1>}, {pipeline_mode = #tpu.pipeline_mode<synchronous>, transform_indices = @transform_5, window_bounds = array<i64: 32, 144>}, {pipeline_mode = #tpu.pipeline_mode<synchronous>, transform_indices = @transform_6, window_bounds = array<i64: 32, 1>}, {transform_indices = @transform_7, window_bounds = array<i64: 1, 32, 128>}]} {
    %c0 = arith.constant 0 : index
    %c0_0 = arith.constant 0 : index
    %0 = vector.load %arg5[%c0, %c0_0] : memref<16x32xf32, #tpu.memory_space<vmem>>, vector<16x32xf32>
    %c0_1 = arith.constant 0 : index
    %c0_2 = arith.constant 0 : index
    %1 = vector.load %arg6[%c0_1, %c0_2] : memref<16x1xf32, #tpu.memory_space<vmem>>, vector<16x1xf32>
    %cst = arith.constant 0.000000e+00 : f32
    %2 = vector.broadcast %cst : f32 to vector<16x16xf32>
    %c0_3 = arith.constant 0 : index
    %c0_4 = arith.constant 0 : index
    %3 = vector.load %arg10[%c0_3, %c0_4] : memref<16x192xf32, #tpu.memory_space<vmem>>, vector<16x16xf32>
    tpu.vector_store %arg10[%c0_3, %c0_4], %2 {strides = array<i32>} : memref<16x192xf32, #tpu.memory_space<vmem>>, vector<16x16xf32>,
    %c0_5 = arith.constant 0 : index
    %c176 = arith.constant 176 : index
    %4 = vector.load %arg10[%c0_5, %c176] : memref<16x192xf32, #tpu.memory_space<vmem>>, vector<16x16xf32>
    tpu.vector_store %arg10[%c0_5, %c176], %2 {strides = array<i32>} : memref<16x192xf32, #tpu.memory_space<vmem>>, vector<16x16xf32>,
    %c0_6 = arith.constant 0 : index
    %c0_7 = arith.constant 0 : index
    %c0_8 = arith.constant 0 : index
    %5 = vector.load %arg3[%c0_6, %c0_7, %c0_8] : memref<1x32x128xf32, #tpu.memory_space<vmem>>, vector<1x32x128xf32>
    %6 = vector.shape_cast %5 : vector<1x32x128xf32> to vector<32x128xf32>
    %cst_9 = arith.constant dense<0.000000e+00> : vector<16x128xf32>
    %7 = tpu.matmul %0, %6, %cst_9 {dimension_numbers = #tpu.dot_dimension_numbers<[1], [0], [0], [1], [0, 0, 1, 1], [], []>} : vector<16x32xf32>, vector<32x128xf32>, vector<16x128xf32> -> vector<16x128xf32>
    %8 = vector.broadcast %1 : vector<16x1xf32> to vector<16x128xf32>
    %9 = arith.addf %7, %8 : vector<16x128xf32>
    %cst_10 = arith.constant 0.000000e+00 : f32
    %10 = vector.broadcast %cst_10 : f32 to vector<16x128xf32>
    %11 = arith.cmpf ogt, %9, %10 : vector<16x128xf32>
    %cst_11 = arith.constant 1.000000e-01 : f32
    %12 = vector.broadcast %cst_11 : f32 to vector<16x128xf32>
    %13 = arith.mulf %12, %9 : vector<16x128xf32>
    %14 = arith.select %11, %9, %13 : vector<16x128xi1>, vector<16x128xf32>
    %c0_12 = arith.constant 0 : index
    %c32 = arith.constant 32 : index
    %15 = vector.load %arg10[%c0_12, %c32] : memref<16x192xf32, #tpu.memory_space<vmem>>, vector<16x128xf32>
    tpu.vector_store %arg10[%c0_12, %c32], %14 {strides = array<i32>} : memref<16x192xf32, #tpu.memory_space<vmem>>, vector<16x128xf32>,
    %c0_i32 = arith.constant 0 : i32
    %16 = arith.cmpi eq, %arg1, %c0_i32 : i32
    %17 = arith.extui %16 : i1 to i32
    %c0_i32_13 = arith.constant 0 : i32
    %18 = arith.cmpi ne, %17, %c0_i32_13 : i32
    scf.if %18 {
      %c0_45 = arith.constant 0 : index
      %c16_46 = arith.constant 16 : index
      %84 = vector.load %arg10[%c0_45, %c16_46] : memref<16x192xf32, #tpu.memory_space<vmem>>, vector<16x16xf32>
      tpu.vector_store %arg10[%c0_45, %c16_46], %2 {strides = array<i32>} : memref<16x192xf32, #tpu.memory_space<vmem>>, vector<16x16xf32>,
    } else {
    }
    %c0_i32_14 = arith.constant 0 : i32
    %19 = arith.cmpi sgt, %arg1, %c0_i32_14 : i32
    %20 = arith.extui %19 : i1 to i32
    %c0_i32_15 = arith.constant 0 : i32
    %21 = arith.cmpi ne, %20, %c0_i32_15 : i32
    scf.if %21 {
      %c0_45 = arith.constant 0 : index
      %c0_46 = arith.constant 0 : index
      %c112_47 = arith.constant 112 : index
      %84 = vector.load %arg2[%c0_45, %c0_46, %c112_47] : memref<1x32x128xf32, #tpu.memory_space<vmem>>, vector<1x32x16xf32>
      %85 = vector.shape_cast %84 : vector<1x32x16xf32> to vector<32x16xf32>
      %cst_48 = arith.constant dense<0.000000e+00> : vector<16x16xf32>
      %86 = tpu.matmul %0, %85, %cst_48 {dimension_numbers = #tpu.dot_dimension_numbers<[1], [0], [0], [1], [0, 0, 1, 1], [], []>} : vector<16x32xf32>, vector<32x16xf32>, vector<16x16xf32> -> vector<16x16xf32>
      %87 = vector.broadcast %1 : vector<16x1xf32> to vector<16x16xf32>
      %88 = arith.addf %86, %87 : vector<16x16xf32>
      %cst_49 = arith.constant 0.000000e+00 : f32
      %89 = vector.broadcast %cst_49 : f32 to vector<16x16xf32>
      %90 = arith.cmpf ogt, %88, %89 : vector<16x16xf32>
      %cst_50 = arith.constant 1.000000e-01 : f32
      %91 = vector.broadcast %cst_50 : f32 to vector<16x16xf32>
      %92 = arith.mulf %91, %88 : vector<16x16xf32>
      %93 = arith.select %90, %88, %92 : vector<16x16xi1>, vector<16x16xf32>
      %c0_51 = arith.constant 0 : index
      %c16_52 = arith.constant 16 : index
      %94 = vector.load %arg10[%c0_51, %c16_52] : memref<16x192xf32, #tpu.memory_space<vmem>>, vector<16x16xf32>
      tpu.vector_store %arg10[%c0_51, %c16_52], %93 {strides = array<i32>} : memref<16x192xf32, #tpu.memory_space<vmem>>, vector<16x16xf32>,
    } else {
    }
    %c1_i32 = arith.constant 1 : i32
    %22 = arith.cmpi eq, %arg1, %c1_i32 : i32
    %23 = arith.extui %22 : i1 to i32
    %c0_i32_16 = arith.constant 0 : i32
    %24 = arith.cmpi ne, %23, %c0_i32_16 : i32
    scf.if %24 {
      %c0_45 = arith.constant 0 : index
      %c160 = arith.constant 160 : index
      %84 = vector.load %arg10[%c0_45, %c160] : memref<16x192xf32, #tpu.memory_space<vmem>>, vector<16x16xf32>
      tpu.vector_store %arg10[%c0_45, %c160], %2 {strides = array<i32>} : memref<16x192xf32, #tpu.memory_space<vmem>>, vector<16x16xf32>,
    } else {
    }
    %c1_i32_17 = arith.constant 1 : i32
    %25 = arith.cmpi slt, %arg1, %c1_i32_17 : i32
    %26 = arith.extui %25 : i1 to i32
    %c0_i32_18 = arith.constant 0 : i32
    %27 = arith.cmpi ne, %26, %c0_i32_18 : i32
    scf.if %27 {
      %c0_45 = arith.constant 0 : index
      %c0_46 = arith.constant 0 : index
      %c0_47 = arith.constant 0 : index
      %84 = vector.load %arg4[%c0_45, %c0_46, %c0_47] : memref<1x32x128xf32, #tpu.memory_space<vmem>>, vector<1x32x16xf32>
      %85 = vector.shape_cast %84 : vector<1x32x16xf32> to vector<32x16xf32>
      %cst_48 = arith.constant dense<0.000000e+00> : vector<16x16xf32>
      %86 = tpu.matmul %0, %85, %cst_48 {dimension_numbers = #tpu.dot_dimension_numbers<[1], [0], [0], [1], [0, 0, 1, 1], [], []>} : vector<16x32xf32>, vector<32x16xf32>, vector<16x16xf32> -> vector<16x16xf32>
      %87 = vector.broadcast %1 : vector<16x1xf32> to vector<16x16xf32>
      %88 = arith.addf %86, %87 : vector<16x16xf32>
      %cst_49 = arith.constant 0.000000e+00 : f32
      %89 = vector.broadcast %cst_49 : f32 to vector<16x16xf32>
      %90 = arith.cmpf ogt, %88, %89 : vector<16x16xf32>
      %cst_50 = arith.constant 1.000000e-01 : f32
      %91 = vector.broadcast %cst_50 : f32 to vector<16x16xf32>
      %92 = arith.mulf %91, %88 : vector<16x16xf32>
      %93 = arith.select %90, %88, %92 : vector<16x16xi1>, vector<16x16xf32>
      %c0_51 = arith.constant 0 : index
      %c160 = arith.constant 160 : index
      %94 = vector.load %arg10[%c0_51, %c160] : memref<16x192xf32, #tpu.memory_space<vmem>>, vector<16x16xf32>
      tpu.vector_store %arg10[%c0_51, %c160], %93 {strides = array<i32>} : memref<16x192xf32, #tpu.memory_space<vmem>>, vector<16x16xf32>,
    } else {
    }
    %28 = tpu.iota {dimensions = array<i32: 1>} : vector<1x128xi32>
    %c15_i32 = arith.constant 15 : i32
    %29 = vector.broadcast %c15_i32 : i32 to vector<1x128xi32>
    %30 = arith.andi %28, %29 : vector<1x128xi32>
    %c1_i32_19 = arith.constant 1 : i32
    %31 = vector.broadcast %c1_i32_19 : i32 to vector<1x128xi32>
    %32 = arith.cmpi sge, %30, %31 : vector<1x128xi32>
    %33 = arith.extui %32 : vector<1x128xi1> to vector<1x128xi32>
    %34 = arith.sitofp %33 : vector<1x128xi32> to vector<1x128xf32>
    %c14_i32 = arith.constant 14 : i32
    %35 = vector.broadcast %c14_i32 : i32 to vector<1x128xi32>
    %36 = arith.cmpi sle, %30, %35 : vector<1x128xi32>
    %37 = arith.extui %36 : vector<1x128xi1> to vector<1x128xi32>
    %38 = arith.sitofp %37 : vector<1x128xi32> to vector<1x128xf32>
    %c0_20 = arith.constant 0 : index
    %c0_21 = arith.constant 0 : index
    %39 = vector.load %arg10[%c0_20, %c0_21] : memref<16x192xf32, #tpu.memory_space<vmem>>, vector<16x192xf32>
    %40 = vector.extract_strided_slice %39 {offsets = [0, 15], sizes = [16, 128], strides = [1, 1]} : vector<16x192xf32> to vector<16x128xf32>
    %41 = vector.broadcast %34 : vector<1x128xf32> to vector<16x128xf32>
    %42 = arith.mulf %40, %41 : vector<16x128xf32>
    %c0_22 = arith.constant 0 : index
    %c0_23 = arith.constant 0 : index
    %43 = vector.load %arg11[%c0_22, %c0_23] : memref<144x128xf32, #tpu.memory_space<vmem>>, vector<16x128xf32>
    tpu.vector_store %arg11[%c0_22, %c0_23], %42 {strides = array<i32>} : memref<144x128xf32, #tpu.memory_space<vmem>>, vector<16x128xf32>,
    %44 = vector.extract_strided_slice %39 {offsets = [0, 16], sizes = [16, 128], strides = [1, 1]} : vector<16x192xf32> to vector<16x128xf32>
    %c16 = arith.constant 16 : index
    %c0_24 = arith.constant 0 : index
    %45 = vector.load %arg11[%c16, %c0_24] : memref<144x128xf32, #tpu.memory_space<vmem>>, vector<16x128xf32>
    tpu.vector_store %arg11[%c16, %c0_24], %44 {strides = array<i32>} : memref<144x128xf32, #tpu.memory_space<vmem>>, vector<16x128xf32>,
    %46 = vector.extract_strided_slice %39 {offsets = [0, 17], sizes = [16, 128], strides = [1, 1]} : vector<16x192xf32> to vector<16x128xf32>
    %47 = vector.broadcast %38 : vector<1x128xf32> to vector<16x128xf32>
    %48 = arith.mulf %46, %47 : vector<16x128xf32>
    %c32_25 = arith.constant 32 : index
    %c0_26 = arith.constant 0 : index
    %49 = vector.load %arg11[%c32_25, %c0_26] : memref<144x128xf32, #tpu.memory_space<vmem>>, vector<16x128xf32>
    tpu.vector_store %arg11[%c32_25, %c0_26], %48 {strides = array<i32>} : memref<144x128xf32, #tpu.memory_space<vmem>>, vector<16x128xf32>,
    %50 = vector.extract_strided_slice %39 {offsets = [0, 31], sizes = [16, 128], strides = [1, 1]} : vector<16x192xf32> to vector<16x128xf32>
    %51 = vector.broadcast %34 : vector<1x128xf32> to vector<16x128xf32>
    %52 = arith.mulf %50, %51 : vector<16x128xf32>
    %c48 = arith.constant 48 : index
    %c0_27 = arith.constant 0 : index
    %53 = vector.load %arg11[%c48, %c0_27] : memref<144x128xf32, #tpu.memory_space<vmem>>, vector<16x128xf32>
    tpu.vector_store %arg11[%c48, %c0_27], %52 {strides = array<i32>} : memref<144x128xf32, #tpu.memory_space<vmem>>, vector<16x128xf32>,
    %54 = vector.extract_strided_slice %39 {offsets = [0, 32], sizes = [16, 128], strides = [1, 1]} : vector<16x192xf32> to vector<16x128xf32>
    %c64 = arith.constant 64 : index
    %c0_28 = arith.constant 0 : index
    %55 = vector.load %arg11[%c64, %c0_28] : memref<144x128xf32, #tpu.memory_space<vmem>>, vector<16x128xf32>
    tpu.vector_store %arg11[%c64, %c0_28], %54 {strides = array<i32>} : memref<144x128xf32, #tpu.memory_space<vmem>>, vector<16x128xf32>,
    %56 = vector.extract_strided_slice %39 {offsets = [0, 33], sizes = [16, 128], strides = [1, 1]} : vector<16x192xf32> to vector<16x128xf32>
    %57 = vector.broadcast %38 : vector<1x128xf32> to vector<16x128xf32>
    %58 = arith.mulf %56, %57 : vector<16x128xf32>
    %c80 = arith.constant 80 : index
    %c0_29 = arith.constant 0 : index
    %59 = vector.load %arg11[%c80, %c0_29] : memref<144x128xf32, #tpu.memory_space<vmem>>, vector<16x128xf32>
    tpu.vector_store %arg11[%c80, %c0_29], %58 {strides = array<i32>} : memref<144x128xf32, #tpu.memory_space<vmem>>, vector<16x128xf32>,
    %60 = vector.extract_strided_slice %39 {offsets = [0, 47], sizes = [16, 128], strides = [1, 1]} : vector<16x192xf32> to vector<16x128xf32>
    %61 = vector.broadcast %34 : vector<1x128xf32> to vector<16x128xf32>
    %62 = arith.mulf %60, %61 : vector<16x128xf32>
    %c96 = arith.constant 96 : index
    %c0_30 = arith.constant 0 : index
    %63 = vector.load %arg11[%c96, %c0_30] : memref<144x128xf32, #tpu.memory_space<vmem>>, vector<16x128xf32>
    tpu.vector_store %arg11[%c96, %c0_30], %62 {strides = array<i32>} : memref<144x128xf32, #tpu.memory_space<vmem>>, vector<16x128xf32>,
    %64 = vector.extract_strided_slice %39 {offsets = [0, 48], sizes = [16, 128], strides = [1, 1]} : vector<16x192xf32> to vector<16x128xf32>
    %c112 = arith.constant 112 : index
    %c0_31 = arith.constant 0 : index
    %65 = vector.load %arg11[%c112, %c0_31] : memref<144x128xf32, #tpu.memory_space<vmem>>, vector<16x128xf32>
    tpu.vector_store %arg11[%c112, %c0_31], %64 {strides = array<i32>} : memref<144x128xf32, #tpu.memory_space<vmem>>, vector<16x128xf32>,
    %66 = vector.extract_strided_slice %39 {offsets = [0, 49], sizes = [16, 128], strides = [1, 1]} : vector<16x192xf32> to vector<16x128xf32>
    %67 = vector.broadcast %38 : vector<1x128xf32> to vector<16x128xf32>
    %68 = arith.mulf %66, %67 : vector<16x128xf32>
    %c128 = arith.constant 128 : index
    %c0_32 = arith.constant 0 : index
    %69 = vector.load %arg11[%c128, %c0_32] : memref<144x128xf32, #tpu.memory_space<vmem>>, vector<16x128xf32>
    tpu.vector_store %arg11[%c128, %c0_32], %68 {strides = array<i32>} : memref<144x128xf32, #tpu.memory_space<vmem>>, vector<16x128xf32>,
    %c0_33 = arith.constant 0 : index
    %c0_34 = arith.constant 0 : index
    %70 = vector.load %arg7[%c0_33, %c0_34] : memref<32x144xf32, #tpu.memory_space<vmem>>, vector<32x144xf32>
    %c0_35 = arith.constant 0 : index
    %c0_36 = arith.constant 0 : index
    %71 = vector.load %arg11[%c0_35, %c0_36] : memref<144x128xf32, #tpu.memory_space<vmem>>, vector<144x128xf32>
    %cst_37 = arith.constant dense<0.000000e+00> : vector<32x128xf32>
    %72 = tpu.matmul %70, %71, %cst_37 {dimension_numbers = #tpu.dot_dimension_numbers<[1], [0], [0], [1], [0, 0, 1, 1], [], []>} : vector<32x144xf32>, vector<144x128xf32>, vector<32x128xf32> -> vector<32x128xf32>
    %c0_38 = arith.constant 0 : index
    %c0_39 = arith.constant 0 : index
    %73 = vector.load %arg8[%c0_38, %c0_39] : memref<32x1xf32, #tpu.memory_space<vmem>>, vector<32x1xf32>
    %74 = vector.broadcast %73 : vector<32x1xf32> to vector<32x128xf32>
    %75 = arith.addf %72, %74 : vector<32x128xf32>
    %cst_40 = arith.constant 0.000000e+00 : f32
    %76 = vector.broadcast %cst_40 : f32 to vector<32x128xf32>
    %77 = arith.cmpf ogt, %75, %76 : vector<32x128xf32>
    %cst_41 = arith.constant 1.000000e-01 : f32
    %78 = vector.broadcast %cst_41 : f32 to vector<32x128xf32>
    %79 = arith.mulf %78, %75 : vector<32x128xf32>
    %80 = arith.select %77, %75, %79 : vector<32x128xi1>, vector<32x128xf32>
    %c0_42 = arith.constant 0 : index
    %c0_43 = arith.constant 0 : index
    %c0_44 = arith.constant 0 : index
    %81 = vector.load %arg9[%c0_42, %c0_43, %c0_44] : memref<1x32x128xf32, #tpu.memory_space<vmem>>, vector<1x32x128xf32>
    %82 = vector.shape_cast %81 : vector<1x32x128xf32> to vector<32x128xf32>
    %83 = vector.shape_cast %80 : vector<32x128xf32> to vector<1x32x128xf32>
    tpu.vector_store %arg9[%c0_42, %c0_43, %c0_44], %83 {strides = array<i32>} : memref<1x32x128xf32, #tpu.memory_space<vmem>>, vector<1x32x128xf32>,
    return
  }
  func.func @transform_0(%arg0: i32, %arg1: i32) -> (i32, i32, i32) {
    %c1_i32 = arith.constant 1 : i32
    %0 = arith.muli %arg1, %c1_i32 : i32
    %c1_i32_0 = arith.constant 1 : i32
    %1 = arith.subi %0, %c1_i32_0 : i32
    %c0_i32 = arith.constant 0 : i32
    %2 = arith.maxsi %1, %c0_i32 : i32
    %c0_i32_1 = arith.constant 0 : i32
    %c0_i32_2 = arith.constant 0 : i32
    return %arg0, %c0_i32_1, %2 : i32, i32, i32
  }
  func.func @transform_1(%arg0: i32, %arg1: i32) -> (i32, i32, i32) {
    %c0_i32 = arith.constant 0 : i32
    %c0_i32_0 = arith.constant 0 : i32
    return %arg0, %c0_i32, %arg1 : i32, i32, i32
  }
  func.func @transform_2(%arg0: i32, %arg1: i32) -> (i32, i32, i32) {
    %c1_i32 = arith.constant 1 : i32
    %0 = arith.addi %arg1, %c1_i32 : i32
    %c1_i32_0 = arith.constant 1 : i32
    %1 = arith.muli %0, %c1_i32_0 : i32
    %c1_i32_1 = arith.constant 1 : i32
    %2 = arith.minsi %1, %c1_i32_1 : i32
    %c0_i32 = arith.constant 0 : i32
    %c0_i32_2 = arith.constant 0 : i32
    return %arg0, %c0_i32, %2 : i32, i32, i32
  }
  func.func @transform_3(%arg0: i32, %arg1: i32) -> (i32, i32) {
    %c0_i32 = arith.constant 0 : i32
    %c0_i32_0 = arith.constant 0 : i32
    %c0_i32_1 = arith.constant 0 : i32
    return %c0_i32, %c0_i32_0 : i32, i32
  }
  func.func @transform_4(%arg0: i32, %arg1: i32) -> (i32, i32) {
    %c0_i32 = arith.constant 0 : i32
    %c0_i32_0 = arith.constant 0 : i32
    %c0_i32_1 = arith.constant 0 : i32
    return %c0_i32, %c0_i32_0 : i32, i32
  }
  func.func @transform_5(%arg0: i32, %arg1: i32) -> (i32, i32) {
    %c0_i32 = arith.constant 0 : i32
    %c0_i32_0 = arith.constant 0 : i32
    %c0_i32_1 = arith.constant 0 : i32
    return %c0_i32, %c0_i32_0 : i32, i32
  }
  func.func @transform_6(%arg0: i32, %arg1: i32) -> (i32, i32) {
    %c0_i32 = arith.constant 0 : i32
    %c0_i32_0 = arith.constant 0 : i32
    %c0_i32_1 = arith.constant 0 : i32
    return %c0_i32, %c0_i32_0 : i32, i32
  }
  func.func @transform_7(%arg0: i32, %arg1: i32) -> (i32, i32, i32) {
    %c0_i32 = arith.constant 0 : i32
    %c0_i32_0 = arith.constant 0 : i32
    return %arg0, %c0_i32, %arg1 : i32, i32, i32
  }
}

</mosaic_0001>

<llo_original>
// kernel: tpu_custom_call.1
$region0: #{tpu_custom_call.1}
  #allocation0 [shape = 'u32[]', space=smem, size = 0x4, offset = 0x4, fixed_abs, tag = 'smem constant byte address 0x4 - core index']
  #allocation1 [shape = 'u32[144,128]{1,0:T(1,128)}', space=vmem, size = 0x12000, scoped, tag = 'internal scratch']
  #allocation2 [shape = 'f32[16,192]{1,0:T(8,128)}', space=vmem, size = 0x4000, scoped, tag = 'scratch operand']
  #allocation3 [shape = 'f32[144,128]{1,0:T(8,128)}', space=vmem, size = 0x12000, scoped, tag = 'scratch operand']
  %s0 = inlined_call_operand.hbm [shape: f32[2,32,256], index: 0, kind: input, shape index: {}]
  %s1 = inlined_call_operand.hbm [shape: f32[2,32,256], index: 1, kind: input, shape index: {}]
  %s2 = inlined_call_operand.hbm [shape: f32[2,32,256], index: 2, kind: input, shape index: {}]
  %s3 = inlined_call_operand.hbm [shape: f32[16,32], index: 3, kind: input, shape index: {}]
  %s4 = inlined_call_operand.vmem [shape: f32[16,1], index: 4, kind: input, shape index: {}]
  %s5 = inlined_call_operand.vmem [shape: f32[32,144], index: 5, kind: input, shape index: {}]
  %s6 = inlined_call_operand.vmem [shape: f32[32,1], index: 6, kind: input, shape index: {}]
  %s7 = inlined_call_operand.hbm [shape: f32[2,32,256], index: 7, kind: output, shape index: {}]
  %s8 = sld [smem:[#allocation0]]
  $region93: #{tpu_custom_call.1} parent=0
    _
  %s10 = ssub.s32 1, %s8
  %s11 = scalar_select 0, %s10, %s8
  $region1: #{tpu_custom_call.1} parent=0
    #allocation4 [shape = 'u8[32768]{0}', space=vmem, size = 0x8000, scoped, tag = 'input window, operand 0']
    #allocation5 [shape = 's32[2]{0}', space=sflag, size = 0x8, scoped, tag = 'scoped memory for tpu_custom_call.1']
    #allocation6 [shape = 's32[2]{0}', space=sflag, size = 0x8, scoped, tag = 'scoped memory for tpu_custom_call.1']
    #allocation7 [shape = 'u8[32768]{0}', space=vmem, size = 0x8000, scoped, tag = 'input window, operand 1']
    #allocation8 [shape = 's32[2]{0}', space=sflag, size = 0x8, scoped, tag = 'scoped memory for tpu_custom_call.1']
    #allocation9 [shape = 'u8[32768]{0}', space=vmem, size = 0x8000, scoped, tag = 'input window, operand 2']
    #allocation10 [shape = 'u8[8192]{0}', space=vmem, size = 0x2000, scoped, tag = 'input window, operand 3, single buffered']
    #allocation11 [shape = 's32[1]{0}', space=sflag, size = 0x4, scoped, tag = 'scoped memory for tpu_custom_call.1']
    #allocation12 [shape = 'u8[32768]{0}', space=vmem, size = 0x8000, scoped, tag = 'output window, operand 0']
    %12 = vsyncpa [#allocation5], 0
    %s13 = scalar_lea.sflag [#allocation5], 1
    %14 = vsyncpa %s13, 0
    %15 = vsyncpa [#allocation8], 0
    %s16 = scalar_lea.sflag [#allocation8], 1
    %17 = vsyncpa %s16, 0
    %18 = vsyncpa [#allocation11], 0
    %19 = vsyncpa [#allocation6], 0
    %s20 = scalar_lea.sflag [#allocation6], 1
    %21 = vsyncpa %s20, 0
    loop: start=0, step=1, limit=6
    $region2: #{tpu_custom_call.1} parent=1 // loop_pre_header
      _
    $region3: #{tpu_custom_call.1} parent=1 // loop_header
      %s23 = sphi 0, %s27
      %p24 = scmp.ge.s32.totalorder %s23, 6
      %s30 = sphi 0, %s42
      %s31 = sphi 0, %s38
      %s32 = sphi 0, %s30
      %s33 = sphi 0, %s31
      %s34 = sphi 0, %s32
      %s35 = sphi 0, %s33
      %s53 = sphi 0, %s55
      %s56 = sphi 0, %s53
      %s57 = sphi 0, %s56
      %s73 = sphi 0, %s57
      %s81 = sphi 0, %s83
      %s84 = sphi 0, %s81
      %s85 = sphi 0, %s84
      %s101 = sphi 0, %s85
      %s115 = sphi 0, %s117
      %s118 = sphi 0, %s115
      %s119 = sphi 0, %s118
      %s135 = sphi 0, %s119
      %s139 = sphi 0, %s139
      %s141 = sphi 0, %s139
      %s142 = sphi 0, %s141
      %s156 = sphi 0, %s142
      %s160 = sphi 0, %s160
      %s162 = sphi 0, %s160
      %s163 = sphi 0, %s162
      %s177 = sphi 0, %s163
      %s181 = sphi 0, %s181
      %s183 = sphi 0, %s181
      %s184 = sphi 0, %s183
      %s198 = sphi 0, %s184
      %s202 = sphi 0, %s202
      %s204 = sphi 0, %s202
      %s205 = sphi 0, %s204
      %s219 = sphi 0, %s205
      %s227 = sphi 0, %s229
      %s230 = sphi 0, %s227
      %s231 = sphi 0, %s230
      %s247 = sphi 0, %s231
    $region4: #{tpu_custom_call.1} parent=1 // loop_header_branch
      %26 = sbr.rel (%p24) target = $region8
    $region5: #{tpu_custom_call.1} parent=1 // loop_body
      %s28 = ssub.s32 %s23, 1
      %s29 = ssub.s32 %s23, 2
      %s36 = sadd.s32 1, %s31
      %p37 = scmp.ge.s32.totalorder %s36, 2
      %s38 = scalar_select %p37, 0, %s36
      %s39 = sadd.s32 1, %s30
      %s40 = scalar_select %p37, %s39, %s30
      %p41 = scmp.ge.s32.totalorder %s40, 2
      %s42 = scalar_select %p41, 0, %s40
      %s43 = ssub.s32 %s31, 1
      %p44 = scmp.gt.s32.totalorder %s43, 0
      %s45 = scalar_select %p44, %s43, 0
      %s46 = ssub.s32 %s38, 1
      %p47 = scmp.gt.s32.totalorder %s46, 0
      %s48 = scalar_select %p47, %s46, 0
      %s49 = ssub.s32 %s30, %s42
      %s50 = ssub.s32 %s45, %s48
      %s51 = sor.u32 %s49, %s50
      %p52 = scmp.eq.s32.totalorder %s51, 0
      %s54 = sadd.s32 %s53, 1
      %s55 = scalar_select %p52, %s53, %s54
      %p58 = pneg %p52
      %p59 = scmp.eq.s32.totalorder %s23, 3
      %p60 = por %p58, %p59
      %p61 = scmp.ne.s32.totalorder %s53, %s56
      %p62 = scmp.eq.s32.totalorder %s23, 0
      %p63 = por %p61, %p62
      %p64 = scmp.ne.s32.totalorder %s53, %s56
      %p65 = scmp.eq.s32.totalorder %s28, 3
      %p66 = por %p64, %p65
      %p67 = scmp.ne.s32.totalorder %s56, %s57
      %p68 = scmp.eq.s32.totalorder %s28, 0
      %p69 = por %p67, %p68
      %p70 = scmp.ne.s32.totalorder %s56, %s57
      %p71 = scmp.eq.s32.totalorder %s29, 3
      %p72 = por %p70, %p71
      %p74 = scmp.ne.s32.totalorder %s57, %s73
      %p75 = scmp.eq.s32.totalorder %s29, 0
      %p76 = por %p74, %p75
      %s77 = ssub.s32 %s30, %s42
      %s78 = ssub.s32 %s31, %s38
      %s79 = sor.u32 %s77, %s78
      %p80 = scmp.eq.s32.totalorder %s79, 0
      %s82 = sadd.s32 %s81, 1
      %s83 = scalar_select %p80, %s81, %s82
      %p86 = pneg %p80
      %p87 = scmp.eq.s32.totalorder %s23, 3
      %p88 = por %p86, %p87
      %p89 = scmp.ne.s32.totalorder %s81, %s84
      %p90 = scmp.eq.s32.totalorder %s23, 0
      %p91 = por %p89, %p90
      %p92 = scmp.ne.s32.totalorder %s81, %s84
      %p93 = scmp.eq.s32.totalorder %s28, 3
      %p94 = por %p92, %p93
      %p95 = scmp.ne.s32.totalorder %s84, %s85
      %p96 = scmp.eq.s32.totalorder %s28, 0
      %p97 = por %p95, %p96
      %p98 = scmp.ne.s32.totalorder %s84, %s85
      %p99 = scmp.eq.s32.totalorder %s29, 3
      %p100 = por %p98, %p99
      %p102 = scmp.ne.s32.totalorder %s85, %s101
      %p103 = scmp.eq.s32.totalorder %s29, 0
      %p104 = por %p102, %p103
      %s105 = sadd.s32 %s31, 1
      %p106 = scmp.lt.s32.totalorder %s105, 1
      %s107 = scalar_select %p106, %s105, 1
      %s108 = sadd.s32 %s38, 1
      %p109 = scmp.lt.s32.totalorder %s108, 1
      %s110 = scalar_select %p109, %s108, 1
      %s111 = ssub.s32 %s30, %s42
      %s112 = ssub.s32 %s107, %s110
      %s113 = sor.u32 %s111, %s112
      %p114 = scmp.eq.s32.totalorder %s113, 0
      %s116 = sadd.s32 %s115, 1
      %s117 = scalar_select %p114, %s115, %s116
      %p120 = pneg %p114
      %p121 = scmp.eq.s32.totalorder %s23, 3
      %p122 = por %p120, %p121
      %p123 = scmp.ne.s32.totalorder %s115, %s118
      %p124 = scmp.eq.s32.totalorder %s23, 0
      %p125 = por %p123, %p124
      %p126 = scmp.ne.s32.totalorder %s115, %s118
      %p127 = scmp.eq.s32.totalorder %s28, 3
      %p128 = por %p126, %p127
      %p129 = scmp.ne.s32.totalorder %s118, %s119
      %p130 = scmp.eq.s32.totalorder %s28, 0
      %p131 = por %p129, %p130
      %p132 = scmp.ne.s32.totalorder %s118, %s119
      %p133 = scmp.eq.s32.totalorder %s29, 3
      %p134 = por %p132, %p133
      %p136 = scmp.ne.s32.totalorder %s119, %s135
      %p137 = scmp.eq.s32.totalorder %s29, 0
      %p138 = por %p136, %p137
      %s140 = sadd.s32 %s139, 1
      %p143 = scmp.eq.s32.totalorder %s23, 3
      %p144 = scmp.ne.s32.totalorder %s139, %s141
      %p145 = scmp.eq.s32.totalorder %s23, 0
      %p146 = por %p144, %p145
      %p147 = scmp.ne.s32.totalorder %s139, %s141
      %p148 = scmp.eq.s32.totalorder %s28, 3
      %p149 = por %p147, %p148
      %p150 = scmp.ne.s32.totalorder %s141, %s142
      %p151 = scmp.eq.s32.totalorder %s28, 0
      %p152 = por %p150, %p151
      %p153 = scmp.ne.s32.totalorder %s141, %s142
      %p154 = scmp.eq.s32.totalorder %s29, 3
      %p155 = por %p153, %p154
      %p157 = scmp.ne.s32.totalorder %s142, %s156
      %p158 = scmp.eq.s32.totalorder %s29, 0
      %p159 = por %p157, %p158
      %s161 = sadd.s32 %s160, 1
      %p164 = scmp.eq.s32.totalorder %s23, 3
      %p165 = scmp.ne.s32.totalorder %s160, %s162
      %p166 = scmp.eq.s32.totalorder %s23, 0
      %p167 = por %p165, %p166
      %p168 = scmp.ne.s32.totalorder %s160, %s162
      %p169 = scmp.eq.s32.totalorder %s28, 3
      %p170 = por %p168, %p169
      %p171 = scmp.ne.s32.totalorder %s162, %s163
      %p172 = scmp.eq.s32.totalorder %s28, 0
      %p173 = por %p171, %p172
      %p174 = scmp.ne.s32.totalorder %s162, %s163
      %p175 = scmp.eq.s32.totalorder %s29, 3
      %p176 = por %p174, %p175
      %p178 = scmp.ne.s32.totalorder %s163, %s177
      %p179 = scmp.eq.s32.totalorder %s29, 0
      %p180 = por %p178, %p179
      %s182 = sadd.s32 %s181, 1
      %p185 = scmp.eq.s32.totalorder %s23, 3
      %p186 = scmp.ne.s32.totalorder %s181, %s183
      %p187 = scmp.eq.s32.totalorder %s23, 0
      %p188 = por %p186, %p187
      %p189 = scmp.ne.s32.totalorder %s181, %s183
      %p190 = scmp.eq.s32.totalorder %s28, 3
      %p191 = por %p189, %p190
      %p192 = scmp.ne.s32.totalorder %s183, %s184
      %p193 = scmp.eq.s32.totalorder %s28, 0
      %p194 = por %p192, %p193
      %p195 = scmp.ne.s32.totalorder %s183, %s184
      %p196 = scmp.eq.s32.totalorder %s29, 3
      %p197 = por %p195, %p196
      %p199 = scmp.ne.s32.totalorder %s184, %s198
      %p200 = scmp.eq.s32.totalorder %s29, 0
      %p201 = por %p199, %p200
      %s203 = sadd.s32 %s202, 1
      %p206 = scmp.eq.s32.totalorder %s23, 3
      %p207 = scmp.ne.s32.totalorder %s202, %s204
      %p208 = scmp.eq.s32.totalorder %s23, 0
      %p209 = por %p207, %p208
      %p210 = scmp.ne.s32.totalorder %s202, %s204
      %p211 = scmp.eq.s32.totalorder %s28, 3
      %p212 = por %p210, %p211
      %p213 = scmp.ne.s32.totalorder %s204, %s205
      %p214 = scmp.eq.s32.totalorder %s28, 0
      %p215 = por %p213, %p214
      %p216 = scmp.ne.s32.totalorder %s204, %s205
      %p217 = scmp.eq.s32.totalorder %s29, 3
      %p218 = por %p216, %p217
      %p220 = scmp.ne.s32.totalorder %s205, %s219
      %p221 = scmp.eq.s32.totalorder %s29, 0
      %p222 = por %p220, %p221
      %s223 = ssub.s32 %s30, %s42
      %s224 = ssub.s32 %s31, %s38
      %s225 = sor.u32 %s223, %s224
      %p226 = scmp.eq.s32.totalorder %s225, 0
      %s228 = sadd.s32 %s227, 1
      %s229 = scalar_select %p226, %s227, %s228
      %p232 = pneg %p226
      %p233 = scmp.eq.s32.totalorder %s23, 3
      %p234 = por %p232, %p233
      %p235 = scmp.ne.s32.totalorder %s227, %s230
      %p236 = scmp.eq.s32.totalorder %s23, 0
      %p237 = por %p235, %p236
      %p238 = scmp.ne.s32.totalorder %s227, %s230
      %p239 = scmp.eq.s32.totalorder %s28, 3
      %p240 = por %p238, %p239
      %p241 = scmp.ne.s32.totalorder %s230, %s231
      %p242 = scmp.eq.s32.totalorder %s28, 0
      %p243 = por %p241, %p242
      %p244 = scmp.ne.s32.totalorder %s230, %s231
      %p245 = scmp.eq.s32.totalorder %s29, 3
      %p246 = por %p244, %p245
      %p248 = scmp.ne.s32.totalorder %s231, %s247
      %p249 = scmp.eq.s32.totalorder %s29, 0
      %p250 = por %p248, %p249
      %p251 = scmp.le.s32.totalorder 1, %s23
      %p252 = scmp.lt.s32.totalorder %s23, 5
      %p253 = pnand %p251, %p252
      %p254 = pneg %p253
      // Predicated region
      $region9: #{tpu_custom_call.1} parent=5 // pred_check
        _
      $region10: #{tpu_custom_call.1} parent=5 // pred_check_branch
        %256 = sbr.rel (%p253) target = $region12
      $region11: #{tpu_custom_call.1} parent=5 // pred_region
        %s257 = ssub.s32 %s23, 1
        // Predicated region
        $region13: #{tpu_custom_call.1} parent=11 // pred_check
          %p258 = pneg %p152
        $region14: #{tpu_custom_call.1} parent=11 // pred_check_branch
          %260 = sbr.rel (%p258) target = $region16
        $region15: #{tpu_custom_call.1} parent=11 // pred_region
          %s262 = ssub.s32 256, 256
          %263 = vsyncadd [#allocation11], %s262
          %s264 = sshll.u32 [#allocation10], 4
          %s265 = int_to_ptr.vmem [resolvable:$true] %s264
          %270 = dma.hbm_to_vmem [thread:$0]  %s3, 256, %s265, [#allocation11], 128, 128, 8
        $region16: #{tpu_custom_call.1} parent=11 // pred_fallthru
          _
        // Predicated region
        $region17: #{tpu_custom_call.1} parent=11 // pred_check
          %p271 = pneg %p173
        $region18: #{tpu_custom_call.1} parent=11 // pred_check_branch
          %273 = sbr.rel (%p271) target = $region20
        $region19: #{tpu_custom_call.1} parent=11 // pred_region
          _
        $region20: #{tpu_custom_call.1} parent=11 // pred_fallthru
          _
        // Predicated region
        $region21: #{tpu_custom_call.1} parent=11 // pred_check
          %p274 = pneg %p194
        $region22: #{tpu_custom_call.1} parent=11 // pred_check_branch
          %276 = sbr.rel (%p274) target = $region24
        $region23: #{tpu_custom_call.1} parent=11 // pred_region
          _
        $region24: #{tpu_custom_call.1} parent=11 // pred_fallthru
          _
        // Predicated region
        $region25: #{tpu_custom_call.1} parent=11 // pred_check
          %p277 = pneg %p215
        $region26: #{tpu_custom_call.1} parent=11 // pred_check_branch
          %279 = sbr.rel (%p277) target = $region28
        $region27: #{tpu_custom_call.1} parent=11 // pred_region
          _
        $region28: #{tpu_custom_call.1} parent=11 // pred_fallthru
          _
      $region12: #{tpu_custom_call.1} parent=5 // pred_fallthru
        _
      %p280 = scmp.lt.s32.totalorder %s23, 4
      // Predicated region
      $region29: #{tpu_custom_call.1} parent=5 // pred_check
        %p281 = pneg %p280
      $region30: #{tpu_custom_call.1} parent=5 // pred_check_branch
        %283 = sbr.rel (%p281) target = $region32
      $region31: #{tpu_custom_call.1} parent=5 // pred_region
        // Predicated region
        $region33: #{tpu_custom_call.1} parent=31 // pred_check
          %p284 = pneg %p63
        $region34: #{tpu_custom_call.1} parent=31 // pred_check_branch
          %286 = sbr.rel (%p284) target = $region36
        $region35: #{tpu_custom_call.1} parent=31 // pred_region
          %s287 = sand.u32 %s53, 1
          %s288 = scalar_lea.sflag [#allocation5], %s287
          %s289 = sand.u32 %s53, 1
          %s290 = smul.addr %s289, 32
          %s291 = scalar_lea.vmem [#allocation4], %s290
          %s292 = ssub.s32 %s31, 1
          %p293 = scmp.gt.s32.totalorder %s292, 0
          %s294 = scalar_select %p293, %s292, 0
          %s296 = ssub.s32 512, 512
          %297 = vsyncadd %s288, %s296
          %s298 = smul.addr %s30, 8
          %s299 = sadd.s32 %s294, %s298
          %s300 = smul.addr %s299, 128
          %s301 = scalar_lea.hbm %s0, %s300
          %s302 = sshll.u32 %s291, 4
          %s303 = int_to_ptr.vmem [resolvable:$true] %s302
          %308 = dma.hbm_to_vmem [thread:$0]  %s301, 512, %s303, %s288, 256, 128, 8
        $region36: #{tpu_custom_call.1} parent=31 // pred_fallthru
          _
        // Predicated region
        $region37: #{tpu_custom_call.1} parent=31 // pred_check
          %p309 = pneg %p91
        $region38: #{tpu_custom_call.1} parent=31 // pred_check_branch
          %311 = sbr.rel (%p309) target = $region40
        $region39: #{tpu_custom_call.1} parent=31 // pred_region
          %s312 = sand.u32 %s23, 1
          %s313 = scalar_lea.sflag [#allocation8], %s312
          %s314 = sand.u32 %s81, 1
          %s315 = smul.addr %s314, 32
          %s316 = scalar_lea.vmem [#allocation7], %s315
          %s318 = ssub.s32 512, 512
          %319 = vsyncadd %s313, %s318
          %s320 = smul.addr %s30, 8
          %s321 = sadd.s32 %s31, %s320
          %s322 = smul.addr %s321, 128
          %s323 = scalar_lea.hbm %s1, %s322
          %s324 = sshll.u32 %s316, 4
          %s325 = int_to_ptr.vmem [resolvable:$true] %s324
          %330 = dma.hbm_to_vmem [thread:$0]  %s323, 512, %s325, %s313, 256, 128, 8
        $region40: #{tpu_custom_call.1} parent=31 // pred_fallthru
          _
        // Predicated region
        $region41: #{tpu_custom_call.1} parent=31 // pred_check
          %p331 = pneg %p125
        $region42: #{tpu_custom_call.1} parent=31 // pred_check_branch
          %333 = sbr.rel (%p331) target = $region44
        $region43: #{tpu_custom_call.1} parent=31 // pred_region
          %s334 = sand.u32 %s23, 1
          %s335 = scalar_lea.sflag [#allocation8], %s334
          %s336 = sand.u32 %s115, 1
          %s337 = smul.addr %s336, 32
          %s338 = scalar_lea.vmem [#allocation9], %s337
          %s339 = sadd.s32 %s31, 1
          %p340 = scmp.lt.s32.totalorder %s339, 1
          %s341 = scalar_select %p340, %s339, 1
          %s343 = ssub.s32 512, 512
          %344 = vsyncadd %s335, %s343
          %s345 = smul.addr %s30, 8
          %s346 = sadd.s32 %s341, %s345
          %s347 = smul.addr %s346, 128
          %s348 = scalar_lea.hbm %s2, %s347
          %s349 = sshll.u32 %s338, 4
          %s350 = int_to_ptr.vmem [resolvable:$true] %s349
          %355 = dma.hbm_to_vmem [thread:$0]  %s348, 512, %s350, %s335, 256, 128, 8
        $region44: #{tpu_custom_call.1} parent=31 // pred_fallthru
          _
      $region32: #{tpu_custom_call.1} parent=5 // pred_fallthru
        _
      %p356 = scmp.le.s32.totalorder 1, %s23
      %p357 = scmp.lt.s32.totalorder %s23, 5
      %p358 = pnand %p356, %p357
      %p359 = pneg %p358
      // Predicated region
      $region45: #{tpu_custom_call.1} parent=5 // pred_check
        _
      $region46: #{tpu_custom_call.1} parent=5 // pred_check_branch
        %361 = sbr.rel (%p358) target = $region48
      $region47: #{tpu_custom_call.1} parent=5 // pred_region
        %s362 = ssub.s32 %s23, 1
        %s363 = sand.u32 %s56, 1
        %s364 = scalar_lea.sflag [#allocation5], %s363
        %s365 = sand.u32 %s56, 1
        %s366 = smul.addr %s365, 32
        %s367 = scalar_lea.vmem [#allocation4], %s366
        // Predicated region
        $region49: #{tpu_custom_call.1} parent=47 // pred_check
          %p368 = pneg %p69
        $region50: #{tpu_custom_call.1} parent=47 // pred_check_branch
          %370 = sbr.rel (%p368) target = $region52
        $region51: #{tpu_custom_call.1} parent=47 // pred_region
          %371 = dma.done %s364, 512
        $region52: #{tpu_custom_call.1} parent=47 // pred_fallthru
          _
        %s372 = sand.u32 %s28, 1
        %s373 = scalar_lea.sflag [#allocation8], %s372
        %s374 = sand.u32 %s84, 1
        %s375 = smul.addr %s374, 32
        %s376 = scalar_lea.vmem [#allocation7], %s375
        // Predicated region
        $region53: #{tpu_custom_call.1} parent=47 // pred_check
          %p377 = pneg %p97
        $region54: #{tpu_custom_call.1} parent=47 // pred_check_branch
          %379 = sbr.rel (%p377) target = $region56
        $region55: #{tpu_custom_call.1} parent=47 // pred_region
          %380 = dma.done %s373, 512
        $region56: #{tpu_custom_call.1} parent=47 // pred_fallthru
          _
        %s381 = sand.u32 %s28, 1
        %s382 = scalar_lea.sflag [#allocation8], %s381
        %s383 = sand.u32 %s118, 1
        %s384 = smul.addr %s383, 32
        %s385 = scalar_lea.vmem [#allocation9], %s384
        // Predicated region
        $region57: #{tpu_custom_call.1} parent=47 // pred_check
          %p386 = pneg %p131
        $region58: #{tpu_custom_call.1} parent=47 // pred_check_branch
          %388 = sbr.rel (%p386) target = $region60
        $region59: #{tpu_custom_call.1} parent=47 // pred_region
          %389 = dma.done %s382, 512
        $region60: #{tpu_custom_call.1} parent=47 // pred_fallthru
          _
        // Predicated region
        $region61: #{tpu_custom_call.1} parent=47 // pred_check
          %p390 = pneg %p152
        $region62: #{tpu_custom_call.1} parent=47 // pred_check_branch
          %392 = sbr.rel (%p390) target = $region64
        $region63: #{tpu_custom_call.1} parent=47 // pred_region
          %393 = dma.done [#allocation11], 256
        $region64: #{tpu_custom_call.1} parent=47 // pred_fallthru
          _
        %s394 = sand.u32 %s56, 1
        %s395 = scalar_lea.sflag [#allocation5], %s394
        %s396 = sand.u32 %s56, 1
        %s397 = smul.addr %s396, 32
        %s398 = scalar_lea.vmem [#allocation4], %s397
        %p399 = pneg %p69
        %p400 = pneg %p66
        %s401 = sand.u32 %s28, 1
        %s402 = scalar_lea.sflag [#allocation8], %s401
        %s403 = sand.u32 %s84, 1
        %s404 = smul.addr %s403, 32
        %s405 = scalar_lea.vmem [#allocation7], %s404
        %p406 = pneg %p97
        %p407 = pneg %p94
        %s408 = sand.u32 %s28, 1
        %s409 = scalar_lea.sflag [#allocation8], %s408
        %s410 = sand.u32 %s118, 1
        %s411 = smul.addr %s410, 32
        %s412 = scalar_lea.vmem [#allocation9], %s411
        %p413 = pneg %p131
        %p414 = pneg %p128
        %p415 = pneg %p152
        %p416 = pneg %p149
        %p417 = pneg %p173
        %p418 = pneg %p170
        %p419 = pneg %p194
        %p420 = pneg %p191
        %p421 = pneg %p215
        %p422 = pneg %p212
        %p423 = pneg %p243
        %p424 = pneg %p240
        %s425 = sand.u32 %s230, 1
        %s426 = scalar_lea.sflag [#allocation6], %s425
        %s427 = sand.u32 %s230, 1
        %s428 = smul.addr %s427, 32
        %s429 = scalar_lea.vmem [#allocation12], %s428
        %s430 = ssub.s32 %s33, 1
        %p431 = scmp.gt.s32.totalorder %s430, 0
        %s432 = scalar_select %p431, %s430, 0
        %s433 = sadd.s32 %s33, 1
        %p434 = scmp.lt.s32.totalorder %s433, 1
        %s435 = scalar_select %p434, %s433, 1
        %v436 = vld [vmem:[#allocation10] sm:$0xff]
        %v437 = vld [vmem:[#allocation10 + $0x8] sm:$0xff]
        %v438 = vld [vmem:[%s4] sm:$0xff]
        %v439 = vld [vmem:[%s4 + $0x8] sm:$0xff]
        %vm440 = vcmask 130048
        %441 = vst.msk [vmem:[#allocation2] sm:$0xff] %vm440, 0.0
        %442 = vst.msk [vmem:[#allocation2 + $0x10] sm:$0xff] %vm440, 0.0
        %vm443 = vcmask 523648
        %444 = vst.msk [vmem:[#allocation2 + $0x8] sm:$0xff] %vm443, 0.0
        %445 = vst.msk [vmem:[#allocation2 + $0x18] sm:$0xff] %vm443, 0.0
        %v446 = vld [vmem:[%s376] sm:$0xff]
        %v447 = vld [vmem:[%s376 + $0x8] sm:$0xff]
        %v448 = vld [vmem:[%s376 + $0x10] sm:$0xff]
        %v449 = vld [vmem:[%s376 + $0x18] sm:$0xff]
        %451 = vset.pattern.permute.xlu0 0
        %452 = vperm.xlu0 %451, %v438
        %v453 = vpop.permute.xlu0 %452
        %456 = vset.pattern.permute.xlu0 0
        %457 = vperm.xlu0 %456, %v439
        %v458 = vpop.permute.xlu0 %457
        %vm460 = vcmask 261120
        %v462 = vsel %vm460, %v436, 0
        %v465 = vsel %vm460, %v437, 0
        %467 = vmatprep.subr.mxu0 0.0
        %468 = vmatpush1.msra.mxu0 %v446
        %469 = vmatprep.subr.mxu0 0.0
        %470 = vmatpush1.msra.mxu0 %v447
        %471 = vmatprep.subr.mxu0 0.0
        %472 = vmatpush1.msra.mxu0 %v448
        %473 = vmatprep.subr.mxu0 0.0
        %474 = vmatpush1.msra.mxu0 %v449
        %475 = vmatprep.subr.mxu0 0.0
        %476 = vmatpush1.msra.mxu0 0.0
        %477 = vmatprep.subr.mxu0 0.0
        %478 = vmatpush1.msra.mxu0 0.0
        %479 = vmatprep.subr.mxu0 0.0
        %480 = vmatpush1.msra.mxu0 0.0
        %481 = vmatprep.subr.mxu0 0.0
        %482 = vmatpush1.msra.mxu0 0.0
        %483 = vmatprep.subr.mxu0 0.0
        %484 = vmatpush1.msra.mxu0 0.0
        %485 = vmatprep.subr.mxu0 0.0
        %486 = vmatpush1.msra.mxu0 0.0
        %487 = vmatprep.subr.mxu0 0.0
        %488 = vmatpush1.msra.mxu0 0.0
        %489 = vmatprep.subr.mxu0 0.0
        %490 = vmatpush1.msra.mxu0 0.0
        %491 = vmatprep.subr.mxu0 0.0
        %492 = vmatpush1.msra.mxu0 0.0
        %493 = vmatprep.subr.mxu0 0.0
        %494 = vmatpush1.msra.mxu0 0.0
        %495 = vmatprep.subr.mxu0 0.0
        %496 = vmatpush1.msra.mxu0 0.0
        %497 = vmatprep.subr.mxu0 0.0
        %498 = vmatpush1.msra.mxu0 0.0
        %499 = vmatprep.subr.mxu0 0.0
        %500 = vmatpush1.msra.mxu0 0.0
        %501 = vmatprep.subr.mxu0 0.0
        %502 = vmatpush1.msra.mxu0 0.0
        %503 = vmatprep.subr.mxu0 0.0
        %504 = vmatpush1.msra.mxu0 0.0
        %505 = vmatprep.subr.mxu0 0.0
        %506 = vmatpush1.msra.mxu0 0.0
        %507 = vmatprep.subr.mxu0 0.0
        %508 = vmatpush1.msra.mxu0 0.0
        %509 = vmatprep.subr.mxu0 0.0
        %510 = vmatpush1.msra.mxu0 0.0
        %511 = vmatprep.subr.mxu0 0.0
        %512 = vmatpush1.msra.mxu0 0.0
        %513 = vmatprep.subr.mxu0 0.0
        %514 = vmatpush1.msra.mxu0 0.0
        %515 = vmatprep.subr.mxu0 0.0
        %516 = vmatpush1.msra.mxu0 0.0
        %517 = vmatprep.subr.mxu0 0.0
        %518 = vmatpush1.msra.mxu0 0.0
        %519 = vmatprep.subr.mxu0 0.0
        %520 = vmatpush1.msra.mxu0 0.0
        %521 = vmatprep.subr.mxu0 0.0
        %522 = vmatpush1.msra.mxu0 0.0
        %523 = vmatprep.subr.mxu0 0.0
        %524 = vmatpush1.msra.mxu0 0.0
        %525 = vmatprep.subr.mxu0 0.0
        %526 = vmatpush1.msra.mxu0 0.0
        %527 = vmatprep.subr.mxu0 0.0
        %528 = vmatpush1.msra.mxu0 0.0
        %529 = vmatprep.subr.mxu0 0.0
        %530 = vmatpush1.msra.mxu0 0.0
        %531 = vmatprep.mubr.f32.mxu0 0.0
        %532 = vmatmul.mubr.f32.gmra.mrb[0].mxu0 %v462
        %v533 = vpop.f32.mrb[0].mxu0
        %v534 = vadd.f32 %v453, %v533
        %v535 = vpop.f32.mrb[0].mxu0
        %536 = vmatprep.mubr.f32.mxu0 0.0
        %537 = vmatmul.mubr.f32.gmra.mrb[0].mxu0 %v465
        %v538 = vpop.f32.mrb[0].mxu0
        %v539 = vadd.f32 %v458, %v538
        %v540 = vpop.f32.mrb[0].mxu0
        %541 = vdwg.mxu0
        %vm542 = vcmp.gt.f32.partialorder %v534, 0.0
        %vm543 = vcmp.gt.f32.partialorder %v539, 0.0
        %v544 = vmul.f32 %v534, 0.1
        %v545 = vmul.f32 %v539, 0.1
        %v546 = vsel %vm542, %v534, %v544
        %v547 = vsel %vm543, %v539, %v545
        %550 = vrot.lane.b32.xlu0 %v546, 32
        %v551 = vpop.permute.xlu0 %550
        %552 = vrot.lane.b32.xlu0 %v547, 32
        %v553 = vpop.permute.xlu0 %552
        %vm556 = vcmask 1047808
        %557 = vst.msk [vmem:[#allocation2] sm:$0xff] %vm556, %v551
        %558 = vst.msk [vmem:[#allocation2 + $0x8] sm:$0xff] %vm460, %v551
        %559 = vst.msk [vmem:[#allocation2 + $0x10] sm:$0xff] %vm556, %v553
        %560 = vst.msk [vmem:[#allocation2 + $0x18] sm:$0xff] %vm460, %v553
        %p561 = scmp.eq.s32.totalorder %s33, 0
        // Predicated region
        $region65: #{tpu_custom_call.1} parent=47 // pred_check
          %p562 = pneg %p561
        $region66: #{tpu_custom_call.1} parent=47 // pred_check_branch
          %564 = sbr.rel (%p562) target = $region68
        $region67: #{tpu_custom_call.1} parent=47 // pred_region
          %vm565 = vcmask 261248
          %566 = vst.msk [vmem:[#allocation2] sm:$0xff] %vm565, 0.0
          %567 = vst.msk [vmem:[#allocation2 + $0x10] sm:$0xff] %vm565, 0.0
        $region68: #{tpu_custom_call.1} parent=47 // pred_fallthru
          _
        %p568 = scmp.gt.s32.totalorder %s33, 0
        // Predicated region
        $region69: #{tpu_custom_call.1} parent=47 // pred_check
          %p569 = pneg %p568
        $region70: #{tpu_custom_call.1} parent=47 // pred_check_branch
          %571 = sbr.rel (%p569) target = $region72
        $region71: #{tpu_custom_call.1} parent=47 // pred_region
          %v572 = vld [vmem:[%s367] sm:$0xff]
          %v573 = vld [vmem:[%s367 + $0x8] sm:$0xff]
          %v574 = vld [vmem:[%s367 + $0x10] sm:$0xff]
          %v575 = vld [vmem:[%s367 + $0x18] sm:$0xff]
          %580 = vrot.lane.b32.xlu0 %v572, 16
          %v581 = vpop.permute.xlu0 %580
          %582 = vrot.lane.b32.xlu0 %v573, 16
          %v583 = vpop.permute.xlu0 %582
          %584 = vrot.lane.b32.xlu0 %v574, 16
          %v585 = vpop.permute.xlu0 %584
          %586 = vrot.lane.b32.xlu0 %v575, 16
          %v587 = vpop.permute.xlu0 %586
          %592 = vmatprep.subr.mxu0 0.0
          %593 = vmatpush1.msra.mxu0 %v581
          %594 = vmatprep.subr.mxu0 0.0
          %595 = vmatpush1.msra.mxu0 %v583
          %596 = vmatprep.subr.mxu0 0.0
          %597 = vmatpush1.msra.mxu0 %v585
          %598 = vmatprep.subr.mxu0 0.0
          %599 = vmatpush1.msra.mxu0 %v587
          %600 = vmatprep.subr.mxu0 0.0
          %601 = vmatpush1.msra.mxu0 0.0
          %602 = vmatprep.subr.mxu0 0.0
          %603 = vmatpush1.msra.mxu0 0.0
          %604 = vmatprep.subr.mxu0 0.0
          %605 = vmatpush1.msra.mxu0 0.0
          %606 = vmatprep.subr.mxu0 0.0
          %607 = vmatpush1.msra.mxu0 0.0
          %608 = vmatprep.subr.mxu0 0.0
          %609 = vmatpush1.msra.mxu0 0.0
          %610 = vmatprep.subr.mxu0 0.0
          %611 = vmatpush1.msra.mxu0 0.0
          %612 = vmatprep.subr.mxu0 0.0
          %613 = vmatpush1.msra.mxu0 0.0
          %614 = vmatprep.subr.mxu0 0.0
          %615 = vmatpush1.msra.mxu0 0.0
          %616 = vmatprep.subr.mxu0 0.0
          %617 = vmatpush1.msra.mxu0 0.0
          %618 = vmatprep.subr.mxu0 0.0
          %619 = vmatpush1.msra.mxu0 0.0
          %620 = vmatprep.subr.mxu0 0.0
          %621 = vmatpush1.msra.mxu0 0.0
          %622 = vmatprep.subr.mxu0 0.0
          %623 = vmatpush1.msra.mxu0 0.0
          %624 = vmatprep.subr.mxu0 0.0
          %625 = vmatpush1.msra.mxu0 0.0
          %626 = vmatprep.subr.mxu0 0.0
          %627 = vmatpush1.msra.mxu0 0.0
          %628 = vmatprep.subr.mxu0 0.0
          %629 = vmatpush1.msra.mxu0 0.0
          %630 = vmatprep.subr.mxu0 0.0
          %631 = vmatpush1.msra.mxu0 0.0
          %632 = vmatprep.subr.mxu0 0.0
          %633 = vmatpush1.msra.mxu0 0.0
          %634 = vmatprep.subr.mxu0 0.0
          %635 = vmatpush1.msra.mxu0 0.0
          %636 = vmatprep.subr.mxu0 0.0
          %637 = vmatpush1.msra.mxu0 0.0
          %638 = vmatprep.subr.mxu0 0.0
          %639 = vmatpush1.msra.mxu0 0.0
          %640 = vmatprep.subr.mxu0 0.0
          %641 = vmatpush1.msra.mxu0 0.0
          %642 = vmatprep.subr.mxu0 0.0
          %643 = vmatpush1.msra.mxu0 0.0
          %644 = vmatprep.subr.mxu0 0.0
          %645 = vmatpush1.msra.mxu0 0.0
          %646 = vmatprep.subr.mxu0 0.0
          %647 = vmatpush1.msra.mxu0 0.0
          %648 = vmatprep.subr.mxu0 0.0
          %649 = vmatpush1.msra.mxu0 0.0
          %650 = vmatprep.subr.mxu0 0.0
          %651 = vmatpush1.msra.mxu0 0.0
          %652 = vmatprep.subr.mxu0 0.0
          %653 = vmatpush1.msra.mxu0 0.0
          %654 = vmatprep.subr.mxu0 0.0
          %655 = vmatpush1.msra.mxu0 0.0
          %656 = vmatprep.mubr.f32.mxu0 0.0
          %657 = vmatmul.mubr.f32.gmra.mrb[0].mxu0 %v462
          %v658 = vpop.f32.mrb[0].mxu0
          %v659 = vadd.f32 %v453, %v658
          %v660 = vpop.f32.mrb[0].mxu0
          %661 = vmatprep.mubr.f32.mxu0 0.0
          %662 = vmatmul.mubr.f32.gmra.mrb[0].mxu0 %v465
          %v663 = vpop.f32.mrb[0].mxu0
          %v664 = vadd.f32 %v458, %v663
          %v665 = vpop.f32.mrb[0].mxu0
          %666 = vdwg.mxu0
          %vm667 = vcmp.gt.f32.partialorder %v659, 0.0
          %vm668 = vcmp.gt.f32.partialorder %v664, 0.0
          %v669 = vmul.f32 %v659, 0.1
          %v670 = vmul.f32 %v664, 0.1
          %v671 = vsel %vm667, %v659, %v669
          %v672 = vsel %vm668, %v664, %v670
          %675 = vrot.lane.b32.xlu0 %v671, 16
          %v676 = vpop.permute.xlu0 %675
          %677 = vrot.lane.b32.xlu0 %v672, 16
          %v678 = vpop.permute.xlu0 %677
          %vm681 = vcmask 261248
          %682 = vst.msk [vmem:[#allocation2] sm:$0xff] %vm681, %v676
          %683 = vst.msk [vmem:[#allocation2 + $0x10] sm:$0xff] %vm681, %v678
        $region72: #{tpu_custom_call.1} parent=47 // pred_fallthru
          _
        %p684 = scmp.eq.s32.totalorder %s33, 1
        // Predicated region
        $region73: #{tpu_custom_call.1} parent=47 // pred_check
          %p685 = pneg %p684
        $region74: #{tpu_custom_call.1} parent=47 // pred_check_branch
          %687 = sbr.rel (%p685) target = $region76
        $region75: #{tpu_custom_call.1} parent=47 // pred_region
          %vm688 = vcmask 392448
          %689 = vst.msk [vmem:[#allocation2 + $0x8] sm:$0xff] %vm688, 0.0
          %690 = vst.msk [vmem:[#allocation2 + $0x18] sm:$0xff] %vm688, 0.0
        $region76: #{tpu_custom_call.1} parent=47 // pred_fallthru
          _
        %p691 = scmp.lt.s32.totalorder %s33, 1
        // Predicated region
        $region77: #{tpu_custom_call.1} parent=47 // pred_check
          %p692 = pneg %p691
        $region78: #{tpu_custom_call.1} parent=47 // pred_check_branch
          %694 = sbr.rel (%p692) target = $region80
        $region79: #{tpu_custom_call.1} parent=47 // pred_region
          %v695 = vld [vmem:[%s385] sm:$0xff]
          %v696 = vld [vmem:[%s385 + $0x8] sm:$0xff]
          %v697 = vld [vmem:[%s385 + $0x10] sm:$0xff]
          %v698 = vld [vmem:[%s385 + $0x18] sm:$0xff]
          %699 = vmatprep.subr.mxu0 0.0
          %700 = vmatpush1.msra.mxu0 %v695
          %701 = vmatprep.subr.mxu0 0.0
          %702 = vmatpush1.msra.mxu0 %v696
          %703 = vmatprep.subr.mxu0 0.0
          %704 = vmatpush1.msra.mxu0 %v697
          %705 = vmatprep.subr.mxu0 0.0
          %706 = vmatpush1.msra.mxu0 %v698
          %707 = vmatprep.subr.mxu0 0.0
          %708 = vmatpush1.msra.mxu0 0.0
          %709 = vmatprep.subr.mxu0 0.0
          %710 = vmatpush1.msra.mxu0 0.0
          %711 = vmatprep.subr.mxu0 0.0
          %712 = vmatpush1.msra.mxu0 0.0
          %713 = vmatprep.subr.mxu0 0.0
          %714 = vmatpush1.msra.mxu0 0.0
          %715 = vmatprep.subr.mxu0 0.0
          %716 = vmatpush1.msra.mxu0 0.0
          %717 = vmatprep.subr.mxu0 0.0
          %718 = vmatpush1.msra.mxu0 0.0
          %719 = vmatprep.subr.mxu0 0.0
          %720 = vmatpush1.msra.mxu0 0.0
          %721 = vmatprep.subr.mxu0 0.0
          %722 = vmatpush1.msra.mxu0 0.0
          %723 = vmatprep.subr.mxu0 0.0
          %724 = vmatpush1.msra.mxu0 0.0
          %725 = vmatprep.subr.mxu0 0.0
          %726 = vmatpush1.msra.mxu0 0.0
          %727 = vmatprep.subr.mxu0 0.0
          %728 = vmatpush1.msra.mxu0 0.0
          %729 = vmatprep.subr.mxu0 0.0
          %730 = vmatpush1.msra.mxu0 0.0
          %731 = vmatprep.subr.mxu0 0.0
          %732 = vmatpush1.msra.mxu0 0.0
          %733 = vmatprep.subr.mxu0 0.0
          %734 = vmatpush1.msra.mxu0 0.0
          %735 = vmatprep.subr.mxu0 0.0
          %736 = vmatpush1.msra.mxu0 0.0
          %737 = vmatprep.subr.mxu0 0.0
          %738 = vmatpush1.msra.mxu0 0.0
          %739 = vmatprep.subr.mxu0 0.0
          %740 = vmatpush1.msra.mxu0 0.0
          %741 = vmatprep.subr.mxu0 0.0
          %742 = vmatpush1.msra.mxu0 0.0
          %743 = vmatprep.subr.mxu0 0.0
          %744 = vmatpush1.msra.mxu0 0.0
          %745 = vmatprep.subr.mxu0 0.0
          %746 = vmatpush1.msra.mxu0 0.0
          %747 = vmatprep.subr.mxu0 0.0
          %748 = vmatpush1.msra.mxu0 0.0
          %749 = vmatprep.subr.mxu0 0.0
          %750 = vmatpush1.msra.mxu0 0.0
          %751 = vmatprep.subr.mxu0 0.0
          %752 = vmatpush1.msra.mxu0 0.0
          %753 = vmatprep.subr.mxu0 0.0
          %754 = vmatpush1.msra.mxu0 0.0
          %755 = vmatprep.subr.mxu0 0.0
          %756 = vmatpush1.msra.mxu0 0.0
          %757 = vmatprep.subr.mxu0 0.0
          %758 = vmatpush1.msra.mxu0 0.0
          %759 = vmatprep.subr.mxu0 0.0
          %760 = vmatpush1.msra.mxu0 0.0
          %761 = vmatprep.subr.mxu0 0.0
          %762 = vmatpush1.msra.mxu0 0.0
          %763 = vmatprep.mubr.f32.mxu0 0.0
          %764 = vmatmul.mubr.f32.gmra.mrb[0].mxu0 %v462
          %v765 = vpop.f32.mrb[0].mxu0
          %v766 = vadd.f32 %v453, %v765
          %v767 = vpop.f32.mrb[0].mxu0
          %768 = vmatprep.mubr.f32.mxu0 0.0
          %769 = vmatmul.mubr.f32.gmra.mrb[0].mxu0 %v465
          %v770 = vpop.f32.mrb[0].mxu0
          %v771 = vadd.f32 %v458, %v770
          %v772 = vpop.f32.mrb[0].mxu0
          %773 = vdwg.mxu0
          %vm774 = vcmp.gt.f32.partialorder %v766, 0.0
          %vm775 = vcmp.gt.f32.partialorder %v771, 0.0
          %v776 = vmul.f32 %v766, 0.1
          %v777 = vmul.f32 %v771, 0.1
          %v778 = vsel %vm774, %v766, %v776
          %v779 = vsel %vm775, %v771, %v777
          %782 = vrot.lane.b32.xlu0 %v778, 32
          %v783 = vpop.permute.xlu0 %782
          %784 = vrot.lane.b32.xlu0 %v779, 32
          %v785 = vpop.permute.xlu0 %784
          %vm788 = vcmask 392448
          %789 = vst.msk [vmem:[#allocation2 + $0x8] sm:$0xff] %vm788, %v783
          %790 = vst.msk [vmem:[#allocation2 + $0x18] sm:$0xff] %vm788, %v785
        $region80: #{tpu_custom_call.1} parent=47 // pred_fallthru
          _
        %v791 = vlaneseq
        %v792 = vand.u32 %v791, 127
        %v793 = vand.u32 %v792, 15
        %vm794 = vcmp.ge.s32.totalorder %v793, 1
        %v795 = vsel %vm794, 1, 0
        %v796 = vcvt.s32.f32 %v795
        %vm797 = vcmp.le.s32.totalorder %v793, 14
        %v798 = vsel %vm797, 1, 0
        %v799 = vcvt.s32.f32 %v798
        %v800 = vld [vmem:[#allocation2] sm:$0xff]
        %v801 = vld [vmem:[#allocation2 + $0x8] sm:$0xff]
        %v802 = vld [vmem:[#allocation2 + $0x10] sm:$0xff]
        %v803 = vld [vmem:[#allocation2 + $0x18] sm:$0xff]
        %805 = vrot.lane.b32.xlu0 %v796, 15
        %v806 = vpop.permute.xlu0 %805
        %v808 = vmul.f32 %v800, %v806
        %v809 = vmul.f32 %v801, %v806
        %v810 = vmul.f32 %v802, %v806
        %v811 = vmul.f32 %v803, %v806
        %816 = vrot.lane.b32.xlu0 %v808, 113
        %v817 = vpop.permute.xlu0 %816
        %818 = vrot.lane.b32.xlu0 %v809, 113
        %v819 = vpop.permute.xlu0 %818
        %820 = vrot.lane.b32.xlu0 %v810, 113
        %v821 = vpop.permute.xlu0 %820
        %822 = vrot.lane.b32.xlu0 %v811, 113
        %v823 = vpop.permute.xlu0 %822
        %vm824 = vcmask 924672
        %v825 = vsel %vm824, %v817, %v819
        %v826 = vsel %vm824, %v821, %v823
        %829 = vst [vmem:[#allocation3] sm:$0xff] %v825
        %830 = vst [vmem:[#allocation3 + $0x8] sm:$0xff] %v826
        %835 = vrot.lane.b32.xlu0 %v800, 112
        %v836 = vpop.permute.xlu0 %835
        %837 = vrot.lane.b32.xlu0 %v801, 112
        %v838 = vpop.permute.xlu0 %837
        %839 = vrot.lane.b32.xlu0 %v802, 112
        %v840 = vpop.permute.xlu0 %839
        %841 = vrot.lane.b32.xlu0 %v803, 112
        %v842 = vpop.permute.xlu0 %841
        %vm843 = vcmask 916480
        %v844 = vsel %vm843, %v836, %v838
        %v845 = vsel %vm843, %v840, %v842
        %848 = vst [vmem:[#allocation3 + $0x10] sm:$0xff] %v844
        %849 = vst [vmem:[#allocation3 + $0x18] sm:$0xff] %v845
        %851 = vrot.lane.b32.xlu0 %v799, 17
        %v852 = vpop.permute.xlu0 %851
        %v854 = vmul.f32 %v800, %v852
        %v855 = vmul.f32 %v801, %v852
        %v856 = vmul.f32 %v802, %v852
        %v857 = vmul.f32 %v803, %v852
        %862 = vrot.lane.b32.xlu0 %v854, 111
        %v863 = vpop.permute.xlu0 %862
        %864 = vrot.lane.b32.xlu0 %v855, 111
        %v865 = vpop.permute.xlu0 %864
        %866 = vrot.lane.b32.xlu0 %v856, 111
        %v867 = vpop.permute.xlu0 %866
        %868 = vrot.lane.b32.xlu0 %v857, 111
        %v869 = vpop.permute.xlu0 %868
        %vm870 = vcmask 908288
        %v871 = vsel %vm870, %v863, %v865
        %v872 = vsel %vm870, %v867, %v869
        %875 = vst [vmem:[#allocation3 + $0x20] sm:$0xff] %v871
        %876 = vst [vmem:[#allocation3 + $0x28] sm:$0xff] %v872
        %877 = vrot.lane.b32.xlu0 %v796, 31
        %v878 = vpop.permute.xlu0 %877
        %v880 = vmul.f32 %v800, %v878
        %v881 = vmul.f32 %v801, %v878
        %v882 = vmul.f32 %v802, %v878
        %v883 = vmul.f32 %v803, %v878
        %888 = vrot.lane.b32.xlu0 %v880, 97
        %v889 = vpop.permute.xlu0 %888
        %890 = vrot.lane.b32.xlu0 %v881, 97
        %v891 = vpop.permute.xlu0 %890
        %892 = vrot.lane.b32.xlu0 %v882, 97
        %v893 = vpop.permute.xlu0 %892
        %894 = vrot.lane.b32.xlu0 %v883, 97
        %v895 = vpop.permute.xlu0 %894
        %vm896 = vcmask 793600
        %v897 = vsel %vm896, %v889, %v891
        %v898 = vsel %vm896, %v893, %v895
        %901 = vst [vmem:[#allocation3 + $0x30] sm:$0xff] %v897
        %902 = vst [vmem:[#allocation3 + $0x38] sm:$0xff] %v898
        %903 = vrot.lane.b32.xlu0 %v800, 96
        %v904 = vpop.permute.xlu0 %903
        %905 = vrot.lane.b32.xlu0 %v801, 96
        %v906 = vpop.permute.xlu0 %905
        %907 = vrot.lane.b32.xlu0 %v802, 96
        %v908 = vpop.permute.xlu0 %907
        %909 = vrot.lane.b32.xlu0 %v803, 96
        %v910 = vpop.permute.xlu0 %909
        %vm911 = vcmask 785408
        %v912 = vsel %vm911, %v904, %v906
        %v913 = vsel %vm911, %v908, %v910
        %916 = vst [vmem:[#allocation3 + $0x40] sm:$0xff] %v912
        %917 = vst [vmem:[#allocation3 + $0x48] sm:$0xff] %v913
        %918 = vrot.lane.b32.xlu0 %v799, 33
        %v919 = vpop.permute.xlu0 %918
        %v921 = vmul.f32 %v800, %v919
        %v922 = vmul.f32 %v801, %v919
        %v923 = vmul.f32 %v802, %v919
        %v924 = vmul.f32 %v803, %v919
        %929 = vrot.lane.b32.xlu0 %v921, 95
        %v930 = vpop.permute.xlu0 %929
        %931 = vrot.lane.b32.xlu0 %v922, 95
        %v932 = vpop.permute.xlu0 %931
        %933 = vrot.lane.b32.xlu0 %v923, 95
        %v934 = vpop.permute.xlu0 %933
        %935 = vrot.lane.b32.xlu0 %v924, 95
        %v936 = vpop.permute.xlu0 %935
        %vm937 = vcmask 777216
        %v938 = vsel %vm937, %v930, %v932
        %v939 = vsel %vm937, %v934, %v936
        %942 = vst [vmem:[#allocation3 + $0x50] sm:$0xff] %v938
        %943 = vst [vmem:[#allocation3 + $0x58] sm:$0xff] %v939
        %944 = vrot.lane.b32.xlu0 %v796, 47
        %v945 = vpop.permute.xlu0 %944
        %v947 = vmul.f32 %v800, %v945
        %v948 = vmul.f32 %v801, %v945
        %v949 = vmul.f32 %v802, %v945
        %v950 = vmul.f32 %v803, %v945
        %955 = vrot.lane.b32.xlu0 %v947, 81
        %v956 = vpop.permute.xlu0 %955
        %957 = vrot.lane.b32.xlu0 %v948, 81
        %v958 = vpop.permute.xlu0 %957
        %959 = vrot.lane.b32.xlu0 %v949, 81
        %v960 = vpop.permute.xlu0 %959
        %961 = vrot.lane.b32.xlu0 %v950, 81
        %v962 = vpop.permute.xlu0 %961
        %vm963 = vcmask 662528
        %v964 = vsel %vm963, %v956, %v958
        %v965 = vsel %vm963, %v960, %v962
        %968 = vst [vmem:[#allocation3 + $0x60] sm:$0xff] %v964
        %969 = vst [vmem:[#allocation3 + $0x68] sm:$0xff] %v965
        %970 = vrot.lane.b32.xlu0 %v800, 80
        %v971 = vpop.permute.xlu0 %970
        %972 = vrot.lane.b32.xlu0 %v801, 80
        %v973 = vpop.permute.xlu0 %972
        %974 = vrot.lane.b32.xlu0 %v802, 80
        %v975 = vpop.permute.xlu0 %974
        %976 = vrot.lane.b32.xlu0 %v803, 80
        %v977 = vpop.permute.xlu0 %976
        %vm978 = vcmask 654336
        %v979 = vsel %vm978, %v971, %v973
        %v980 = vsel %vm978, %v975, %v977
        %983 = vst [vmem:[#allocation3 + $0x70] sm:$0xff] %v979
        %984 = vst [vmem:[#allocation3 + $0x78] sm:$0xff] %v980
        %985 = vrot.lane.b32.xlu0 %v799, 49
        %v986 = vpop.permute.xlu0 %985
        %v988 = vmul.f32 %v800, %v986
        %v989 = vmul.f32 %v801, %v986
        %v990 = vmul.f32 %v802, %v986
        %v991 = vmul.f32 %v803, %v986
        %996 = vrot.lane.b32.xlu0 %v988, 79
        %v997 = vpop.permute.xlu0 %996
        %998 = vrot.lane.b32.xlu0 %v989, 79
        %v999 = vpop.permute.xlu0 %998
        %1000 = vrot.lane.b32.xlu0 %v990, 79
        %v1001 = vpop.permute.xlu0 %1000
        %1002 = vrot.lane.b32.xlu0 %v991, 79
        %v1003 = vpop.permute.xlu0 %1002
        %vm1004 = vcmask 646144
        %v1005 = vsel %vm1004, %v997, %v999
        %v1006 = vsel %vm1004, %v1001, %v1003
        %1009 = vst [vmem:[#allocation3 + $0x80] sm:$0xff] %v1005
        %1010 = vst [vmem:[#allocation3 + $0x88] sm:$0xff] %v1006
        %v1011 = vld [vmem:[%s5] sm:$0xff]
        %v1012 = vld [vmem:[%s5 + $0x8] sm:$0xff]
        %v1013 = vld [vmem:[%s5 + $0x10] sm:$0xff]
        %v1014 = vld [vmem:[%s5 + $0x18] sm:$0xff]
        %v1015 = vld [vmem:[%s5 + $0x20] sm:$0xff]
        %v1016 = vld [vmem:[%s5 + $0x28] sm:$0xff]
        %v1017 = vld [vmem:[%s5 + $0x30] sm:$0xff]
        %v1018 = vld [vmem:[%s5 + $0x38] sm:$0xff]
        %v1019 = vld [vmem:[#allocation3] sm:$0xff]
        %v1020 = vld [vmem:[#allocation3 + $0x8] sm:$0xff]
        %v1021 = vld [vmem:[#allocation3 + $0x10] sm:$0xff]
        %v1022 = vld [vmem:[#allocation3 + $0x18] sm:$0xff]
        %v1023 = vld [vmem:[#allocation3 + $0x20] sm:$0xff]
        %v1024 = vld [vmem:[#allocation3 + $0x28] sm:$0xff]
        %v1025 = vld [vmem:[#allocation3 + $0x30] sm:$0xff]
        %v1026 = vld [vmem:[#allocation3 + $0x38] sm:$0xff]
        %v1027 = vld [vmem:[#allocation3 + $0x40] sm:$0xff]
        %v1028 = vld [vmem:[#allocation3 + $0x48] sm:$0xff]
        %v1029 = vld [vmem:[#allocation3 + $0x50] sm:$0xff]
        %v1030 = vld [vmem:[#allocation3 + $0x58] sm:$0xff]
        %v1031 = vld [vmem:[#allocation3 + $0x60] sm:$0xff]
        %v1032 = vld [vmem:[#allocation3 + $0x68] sm:$0xff]
        %v1033 = vld [vmem:[#allocation3 + $0x70] sm:$0xff]
        %v1034 = vld [vmem:[#allocation3 + $0x78] sm:$0xff]
        %v1035 = vld [vmem:[#allocation3 + $0x80] sm:$0xff]
        %v1036 = vld [vmem:[#allocation3 + $0x88] sm:$0xff]
        %v1037 = vld [vmem:[%s6] sm:$0xff]
        %v1038 = vld [vmem:[%s6 + $0x8] sm:$0xff]
        %v1039 = vld [vmem:[%s6 + $0x10] sm:$0xff]
        %v1040 = vld [vmem:[%s6 + $0x18] sm:$0xff]
        %1042 = vset.pattern.permute.xlu0 0
        %1043 = vperm.xlu0 %1042, %v1037
        %v1044 = vpop.permute.xlu0 %1043
        %1047 = vset.pattern.permute.xlu0 0
        %1048 = vperm.xlu0 %1047, %v1038
        %v1049 = vpop.permute.xlu0 %1048
        %1052 = vset.pattern.permute.xlu0 0
        %1053 = vperm.xlu0 %1052, %v1039
        %v1054 = vpop.permute.xlu0 %1053
        %1057 = vset.pattern.permute.xlu0 0
        %1058 = vperm.xlu0 %1057, %v1040
        %v1059 = vpop.permute.xlu0 %1058
        %v1062 = vsel %vm440, %v1012, 0
        %v1065 = vsel %vm440, %v1014, 0
        %v1068 = vsel %vm440, %v1016, 0
        %v1071 = vsel %vm440, %v1018, 0
        %1073 = vmatprep.subr.mxu0 0.0
        %1074 = vmatpush1.msra.mxu0 %v1019
        %1075 = vmatprep.subr.mxu0 0.0
        %1076 = vmatpush1.msra.mxu0 %v1020
        %1077 = vmatprep.subr.mxu0 0.0
        %1078 = vmatpush1.msra.mxu0 %v1021
        %1079 = vmatprep.subr.mxu0 0.0
        %1080 = vmatpush1.msra.mxu0 %v1022
        %1081 = vmatprep.subr.mxu0 0.0
        %1082 = vmatpush1.msra.mxu0 %v1023
        %1083 = vmatprep.subr.mxu0 0.0
        %1084 = vmatpush1.msra.mxu0 %v1024
        %1085 = vmatprep.subr.mxu0 0.0
        %1086 = vmatpush1.msra.mxu0 %v1025
        %1087 = vmatprep.subr.mxu0 0.0
        %1088 = vmatpush1.msra.mxu0 %v1026
        %1089 = vmatprep.subr.mxu0 0.0
        %1090 = vmatpush1.msra.mxu0 %v1027
        %1091 = vmatprep.subr.mxu0 0.0
        %1092 = vmatpush1.msra.mxu0 %v1028
        %1093 = vmatprep.subr.mxu0 0.0
        %1094 = vmatpush1.msra.mxu0 %v1029
        %1095 = vmatprep.subr.mxu0 0.0
        %1096 = vmatpush1.msra.mxu0 %v1030
        %1097 = vmatprep.subr.mxu0 0.0
        %1098 = vmatpush1.msra.mxu0 %v1031
        %1099 = vmatprep.subr.mxu0 0.0
        %1100 = vmatpush1.msra.mxu0 %v1032
        %1101 = vmatprep.subr.mxu0 0.0
        %1102 = vmatpush1.msra.mxu0 %v1033
        %1103 = vmatprep.subr.mxu0 0.0
        %1104 = vmatpush1.msra.mxu0 %v1034
        %1105 = vmatprep.subr.mxu0 0.0
        %1106 = vmatpush1.msra.mxu0 %v1035
        %1107 = vmatprep.subr.mxu0 0.0
        %1108 = vmatpush1.msra.mxu0 %v1036
        %1109 = vmatprep.subr.mxu0 0.0
        %1110 = vmatpush1.msra.mxu0 0.0
        %1111 = vmatprep.subr.mxu0 0.0
        %1112 = vmatpush1.msra.mxu0 0.0
        %1113 = vmatprep.subr.mxu0 0.0
        %1114 = vmatpush1.msra.mxu0 0.0
        %1115 = vmatprep.subr.mxu0 0.0
        %1116 = vmatpush1.msra.mxu0 0.0
        %1117 = vmatprep.subr.mxu0 0.0
        %1118 = vmatpush1.msra.mxu0 0.0
        %1119 = vmatprep.subr.mxu0 0.0
        %1120 = vmatpush1.msra.mxu0 0.0
        %1121 = vmatprep.subr.mxu0 0.0
        %1122 = vmatpush1.msra.mxu0 0.0
        %1123 = vmatprep.subr.mxu0 0.0
        %1124 = vmatpush1.msra.mxu0 0.0
        %1125 = vmatprep.subr.mxu0 0.0
        %1126 = vmatpush1.msra.mxu0 0.0
        %1127 = vmatprep.subr.mxu0 0.0
        %1128 = vmatpush1.msra.mxu0 0.0
        %1129 = vmatprep.subr.mxu0 0.0
        %1130 = vmatpush1.msra.mxu0 0.0
        %1131 = vmatprep.subr.mxu0 0.0
        %1132 = vmatpush1.msra.mxu0 0.0
        %1133 = vmatprep.subr.mxu0 0.0
        %1134 = vmatpush1.msra.mxu0 0.0
        %1135 = vmatprep.subr.mxu0 0.0
        %1136 = vmatpush1.msra.mxu0 0.0
        %1137 = vmatprep.mubr.f32.mxu0 %v1062
        %1138 = vmatmul.mubr.f32.gmra.mrb[0].mxu0 %v1011
        %v1139 = vpop.f32.mrb[0].mxu0
        %v1140 = vadd.f32 %v1044, %v1139
        %v1141 = vpop.f32.mrb[0].mxu0
        %1142 = vmatprep.mubr.f32.mxu0 %v1065
        %1143 = vmatmul.mubr.f32.gmra.mrb[0].mxu0 %v1013
        %v1144 = vpop.f32.mrb[0].mxu0
        %v1145 = vadd.f32 %v1049, %v1144
        %v1146 = vpop.f32.mrb[0].mxu0
        %1147 = vmatprep.mubr.f32.mxu0 %v1068
        %1148 = vmatmul.mubr.f32.gmra.mrb[0].mxu0 %v1015
        %v1149 = vpop.f32.mrb[0].mxu0
        %v1150 = vadd.f32 %v1054, %v1149
        %v1151 = vpop.f32.mrb[0].mxu0
        %1152 = vmatprep.mubr.f32.mxu0 %v1071
        %1153 = vmatmul.mubr.f32.gmra.mrb[0].mxu0 %v1017
        %v1154 = vpop.f32.mrb[0].mxu0
        %v1155 = vadd.f32 %v1059, %v1154
        %v1156 = vpop.f32.mrb[0].mxu0
        %1157 = vdwg.mxu0
        %vm1158 = vcmp.gt.f32.partialorder %v1140, 0.0
        %vm1159 = vcmp.gt.f32.partialorder %v1145, 0.0
        %vm1160 = vcmp.gt.f32.partialorder %v1150, 0.0
        %vm1161 = vcmp.gt.f32.partialorder %v1155, 0.0
        %v1162 = vmul.f32 %v1140, 0.1
        %v1163 = vmul.f32 %v1145, 0.1
        %v1164 = vmul.f32 %v1150, 0.1
        %v1165 = vmul.f32 %v1155, 0.1
        %v1166 = vsel %vm1158, %v1140, %v1162
        %v1167 = vsel %vm1159, %v1145, %v1163
        %v1168 = vsel %vm1160, %v1150, %v1164
        %v1169 = vsel %vm1161, %v1155, %v1165
        %1170 = vst [vmem:[%s429] sm:$0xff] %v1166
        %1171 = vst [vmem:[%s429 + $0x8] sm:$0xff] %v1167
        %1172 = vst [vmem:[%s429 + $0x10] sm:$0xff] %v1168
        %1173 = vst [vmem:[%s429 + $0x18] sm:$0xff] %v1169
        %s1174 = sand.u32 %s230, 1
        %s1175 = scalar_lea.sflag [#allocation6], %s1174
        %s1176 = sand.u32 %s230, 1
        %s1177 = smul.addr %s1176, 32
        %s1178 = scalar_lea.vmem [#allocation12], %s1177
        // Predicated region
        $region81: #{tpu_custom_call.1} parent=47 // pred_check
          %p1179 = pneg %p240
        $region82: #{tpu_custom_call.1} parent=47 // pred_check_branch
          %1181 = sbr.rel (%p1179) target = $region84
        $region83: #{tpu_custom_call.1} parent=47 // pred_region
          %s1183 = ssub.s32 512, 512
          %1184 = vsyncadd %s1175, %s1183
          %s1185 = smul.addr %s32, 8
          %s1186 = sadd.s32 %s33, %s1185
          %s1187 = smul.addr %s1186, 128
          %s1188 = scalar_lea.hbm %s7, %s1187
          %s1189 = sshll.u32 %s1178, 4
          %s1190 = int_to_ptr.vmem [resolvable:$true] %s1189
          %1195 = dma.vmem_to_hbm [thread:$0]  %s1190, 512, %s1188, %s1175, 128, 256, 8
        $region84: #{tpu_custom_call.1} parent=47 // pred_fallthru
          _
      $region48: #{tpu_custom_call.1} parent=5 // pred_fallthru
        _
      %p1196 = scmp.le.s32.totalorder 2, %s23
      // Predicated region
      $region85: #{tpu_custom_call.1} parent=5 // pred_check
        %p1197 = pneg %p1196
      $region86: #{tpu_custom_call.1} parent=5 // pred_check_branch
        %1199 = sbr.rel (%p1197) target = $region88
      $region87: #{tpu_custom_call.1} parent=5 // pred_region
        %s1200 = ssub.s32 %s23, 2
        // Predicated region
        $region89: #{tpu_custom_call.1} parent=87 // pred_check
          %p1201 = pneg %p246
        $region90: #{tpu_custom_call.1} parent=87 // pred_check_branch
          %1203 = sbr.rel (%p1201) target = $region92
        $region91: #{tpu_custom_call.1} parent=87 // pred_region
          %s1204 = sand.u32 %s231, 1
          %s1205 = scalar_lea.sflag [#allocation6], %s1204
          %s1206 = sand.u32 %s231, 1
          %s1207 = smul.addr %s1206, 32
          %s1208 = scalar_lea.vmem [#allocation12], %s1207
          %1209 = dma.done %s1205, 512
        $region92: #{tpu_custom_call.1} parent=87 // pred_fallthru
          _
      $region88: #{tpu_custom_call.1} parent=5 // pred_fallthru
        _
    $region6: #{tpu_custom_call.1} parent=1 // loop_footer
      %s27 = sadd.s32 1, %s23
    $region7: #{tpu_custom_call.1} parent=1 // loop_footer_branch
      %22 = sbr.rel target = $region3
    $region8: #{tpu_custom_call.1} parent=1 // loop_exit
      _
    %1210 = vsyncpa [#allocation5], 1
    %s1211 = scalar_lea.sflag [#allocation5], 1
    %1212 = vsyncpa %s1211, 1
    %1213 = vsyncpa [#allocation8], 1
    %s1214 = scalar_lea.sflag [#allocation8], 1
    %1215 = vsyncpa %s1214, 1
    %1216 = vsyncpa [#allocation11], 1
    %1217 = vsyncpa [#allocation6], 1
    %s1218 = scalar_lea.sflag [#allocation6], 1
    %1219 = vsyncpa %s1218, 1

</llo_original>
